<compile_context>
chip_gen: v7x
topology: tpu7x:2x2x1
jax: 0.10.0
libtpu: 0.0.40
codegen_flags: <defaults>
</compile_context>

<pallas_src>
import math
import functools

import jax
import jax.numpy as jnp
from jax.experimental import pallas as pl
from jax.experimental.pallas import tpu as pltpu

_SQRT_2_OVER_PI = math.sqrt(2.0 / math.pi)
_LN_EPS = 1e-5


def _layer_norm(x, gamma, beta, eps=_LN_EPS):
    mu = jnp.mean(x, axis=-1, keepdims=True)
    d = x - mu
    var = jnp.mean(d * d, axis=-1, keepdims=True)
    return d * jax.lax.rsqrt(var + eps) * gamma + beta


def _encoder_kernel(x_ref, ln1_g_ref, ln1_b_ref, wqkv_ref, bqkv_ref,
                    wo_ref, bo_ref, ln2_g_ref, ln2_b_ref,
                    w1_ref, b1_ref, w2_ref, b2_ref,
                    o_ref, resid_ref, *,
                    btile, seq, num_heads, head_dim, compute_dtype,
                    approx_recip):
    hidden = num_heads * head_dim
    rows = btile * seq
    layer = pl.program_id(1)

    # Initialize the f32 VMEM-resident residual stream at the first layer.
    @pl.when(layer == 0)
    def _():
        resid_ref[...] = x_ref[...].astype(jnp.float32)

    x = resid_ref[...]                                         # (rows, hidden) f32

    # ---------------- LayerNorm 1 (f32 stats) ----------------
    h = _layer_norm(x, ln1_g_ref[0], ln1_b_ref[0]).astype(compute_dtype)

    # ---------------- Fused QKV projection (single MXU matmul) ----------------
    # Q weights/bias already carry the 1/sqrt(head_dim) scale (wrapper fold).
    qkv = jnp.dot(h, wqkv_ref[0],
                  preferred_element_type=jnp.float32) + bqkv_ref[0]
    q = qkv[:, :hidden].reshape(btile, seq, hidden)
    k = qkv[:, hidden:2 * hidden].reshape(btile, seq, hidden)
    v = qkv[:, 2 * hidden:].reshape(btile, seq, hidden)

    # ---------------- Per-head attention (static loop, no replication) -------
    ctx_heads = []
    for hd in range(num_heads):
        sl = slice(hd * head_dim, (hd + 1) * head_dim)
        qh = q[..., sl].astype(compute_dtype)                  # (btile, S, dh)
        kh = k[..., sl].astype(compute_dtype)
        vh = v[..., sl].astype(compute_dtype)

        # Scores: contract head_dim directly (no k transpose materialization).
        s = jnp.einsum("bqd,bkd->bqk", qh, kh,
                       preferred_element_type=jnp.float32)     # (btile, S, S)
        m = jnp.max(s, axis=-1, keepdims=True)
        e = jnp.exp(s - m)
        den = jnp.sum(e, axis=-1, keepdims=True)
        if approx_recip:
            p = e * pl.reciprocal(den, approx=True)            # EUP, not VALU div
        else:
            p = e / den
        # attention dropout: identity (eval / p = 0)

        ch = jnp.einsum("bqk,bkd->bqd", p.astype(compute_dtype), vh,
                        preferred_element_type=jnp.float32)    # (btile, S, dh)
        ctx_heads.append(ch.reshape(rows, head_dim).astype(compute_dtype))

    # Concat heads back into a lane-dense (rows, hidden) slab and let the MXU
    # accumulate the head reduction inside a single output-projection matmul.
    ctx = jnp.concatenate(ctx_heads, axis=-1)                  # (rows, hidden)
    attn = jnp.dot(ctx, wo_ref[0],
                   preferred_element_type=jnp.float32) + bo_ref[0]
    # output dropout: identity

    x = x + attn

    # ---------------- LayerNorm 2 + MLP (tanh-approx GELU, f32) --------------
    h2 = _layer_norm(x, ln2_g_ref[0], ln2_b_ref[0]).astype(compute_dtype)
    z = jnp.dot(h2, w1_ref[0], preferred_element_type=jnp.float32) + b1_ref[0]
    z = 0.5 * z * (1.0 + jnp.tanh(_SQRT_2_OVER_PI * (z + 0.044715 * z * z * z)))
    mlp = jnp.dot(z.astype(compute_dtype), w2_ref[0],
                  preferred_element_type=jnp.float32) + b2_ref[0]
    # hidden dropout: identity

    x = x + mlp
    resid_ref[...] = x

    # Single store of the batch tile at the last layer (cast once, not per layer).
    @pl.when(layer == pl.num_programs(1) - 1)
    def _():
        o_ref[...] = x.astype(o_ref.dtype)


def encoder_forward(x, params, *, num_heads, compute_dtype=jnp.bfloat16,
                    batch_tile=None, approx_recip=True,
                    vmem_limit_bytes=64 * 1024 * 1024):
    """x: (B, S, hidden). params: stacked per-layer weights (leading L dim).

    Layouts: wq/wk/wv/wo (L, H, dh, hidden) [(out, in) per head];
    bq/bk/bv (L, H, 1, dh); bo/b2/ln* (L, 1, hidden); w1 (L, hidden, inter);
    b1 (L, 1, inter); w2 (L, inter, hidden).
    Returns (encoded_x, None), matching Encoder.forward(output_attentions=False).
    """
    B, S, hidden = x.shape
    assert hidden % num_heads == 0
    head_dim = hidden // num_heads
    L = params["wq"].shape[0]
    inter = params["w1"].shape[-1]

    if batch_tile is None:
        batch_tile = B
    assert B % batch_tile == 0
    n_btiles = B // batch_tile
    rows = batch_tile * S
    N = B * S

    scale = 1.0 / math.sqrt(head_dim)

    # (L, H, dh, hidden) per-head (out, in) -> (L, hidden_in, H*dh) matmul layout.
    def head_mat(w):
        return jnp.transpose(w, (0, 3, 1, 2)).reshape(L, hidden, hidden)

    wq_m = head_mat(params["wq"] * scale)          # fold 1/sqrt(dh) into Q
    wk_m = head_mat(params["wk"])
    wv_m = head_mat(params["wv"])
    wqkv = jnp.concatenate([wq_m, wk_m, wv_m], axis=-1).astype(compute_dtype)

    bq = (params["bq"] * scale).reshape(L, 1, hidden)
    bk = params["bk"].reshape(L, 1, hidden)
    bv = params["bv"].reshape(L, 1, hidden)
    bqkv = jnp.concatenate([bq, bk, bv], axis=-1).astype(jnp.float32)

    wo = params["wo"].reshape(L, hidden, hidden).astype(compute_dtype)
    w1 = params["w1"].astype(compute_dtype)
    w2 = params["w2"].astype(compute_dtype)

    ln1_g = params["ln1_g"].astype(jnp.float32)
    ln1_b = params["ln1_b"].astype(jnp.float32)
    ln2_g = params["ln2_g"].astype(jnp.float32)
    ln2_b = params["ln2_b"].astype(jnp.float32)
    bo = params["bo"].astype(jnp.float32)
    b1 = params["b1"].astype(jnp.float32)
    b2 = params["b2"].astype(jnp.float32)

    x2d = x.reshape(N, hidden)

    kernel = functools.partial(
        _encoder_kernel, btile=batch_tile, seq=S, num_heads=num_heads,
        head_dim=head_dim, compute_dtype=compute_dtype, approx_recip=approx_recip)

    def lspec(shape):
        """BlockSpec selecting layer `l` along the leading (num_layers) dim."""
        nd = len(shape)
        return pl.BlockSpec((1,) + tuple(shape[1:]),
                            lambda b, l, _nd=nd: (l,) + (0,) * (_nd - 1))

    in_specs = [
        pl.BlockSpec((rows, hidden), lambda b, l: (b, 0)),          # x batch tile
        lspec((L, 1, hidden)), lspec((L, 1, hidden)),               # ln1 g/b
        lspec((L, hidden, 3 * hidden)), lspec((L, 1, 3 * hidden)),  # wqkv, bqkv
        lspec((L, hidden, hidden)), lspec((L, 1, hidden)),          # wo, bo
        lspec((L, 1, hidden)), lspec((L, 1, hidden)),               # ln2 g/b
        lspec((L, hidden, inter)), lspec((L, 1, inter)),            # w1, b1
        lspec((L, inter, hidden)), lspec((L, 1, hidden)),           # w2, b2
    ]

    out2d = pl.pallas_call(
        kernel,
        out_shape=jax.ShapeDtypeStruct((N, hidden), x.dtype),
        grid_spec=pltpu.PrefetchScalarGridSpec(
            num_scalar_prefetch=0,
            grid=(n_btiles, L),                 # batch tiles outer, layers inner
            in_specs=in_specs,
            out_specs=pl.BlockSpec((rows, hidden), lambda b, l: (b, 0)),
            scratch_shapes=[pltpu.VMEM((rows, hidden), jnp.float32)],  # residual
        ),
        compiler_params=pltpu.CompilerParams(
            dimension_semantics=("parallel", "arbitrary"),
            vmem_limit_bytes=vmem_limit_bytes),
    )(x2d, ln1_g, ln1_b, wqkv, bqkv, wo, bo, ln2_g, ln2_b, w1, b1, w2, b2)

    return out2d.reshape(B, S, hidden), None


# ----------------------------- pure-JAX reference -----------------------------
def _encoder_reference(x, params, *, num_heads):
    B, S, hidden = x.shape
    head_dim = hidden // num_heads
    L = params["wq"].shape[0]
    scale = 1.0 / math.sqrt(head_dim)

    def layer_norm(t, g, b, eps=_LN_EPS):
        mu = jnp.mean(t, axis=-1, keepdims=True)
        var = jnp.mean((t - mu) ** 2, axis=-1, keepdims=True)
        return (t - mu) / jnp.sqrt(var + eps) * g + b

    for l in range(L):
        h = layer_norm(x, params["ln1_g"][l, 0], params["ln1_b"][l, 0])
        head_outs = []
        for hd in range(num_heads):
            q = jnp.einsum("bsc,dc->bsd", h, params["wq"][l, hd]) + params["bq"][l, hd, 0]
            k = jnp.einsum("bsc,dc->bsd", h, params["wk"][l, hd]) + params["bk"][l, hd, 0]
            v = jnp.einsum("bsc,dc->bsd", h, params["wv"][l, hd]) + params["bv"][l, hd, 0]
            s = jnp.einsum("bqd,bkd->bqk", q, k) * scale
            p = jax.nn.softmax(s, axis=-1)
            head_outs.append(jnp.einsum("bqk,bkd->bqd", p, v))
        concat = jnp.concatenate(head_outs, axis=-1)
        wo_full = params["wo"][l].reshape(hidden, hidden)
        x = x + (concat @ wo_full + params["bo"][l, 0])
        h2 = layer_norm(x, params["ln2_g"][l, 0], params["ln2_b"][l, 0])
        z = h2 @ params["w1"][l] + params["b1"][l, 0]
        z = 0.5 * z * (1.0 + jnp.tanh(_SQRT_2_OVER_PI * (z + 0.044715 * z ** 3)))
        x = x + (z @ params["w2"][l] + params["b2"][l, 0])
    return x


if __name__ == "__main__":
    # Toy ViT config: hidden_size=32, num_attention_heads=4, intermediate_size=64,
    # num_hidden_layers=2, qkv_bias=True, dropout probs = 0.
    B, S, hidden = 2, 8, 32
    num_heads = 4
    head_dim = hidden // num_heads
    inter = 64
    L = 2

    key = jax.random.PRNGKey(0)
    ks = list(jax.random.split(key, 18))

    def nrm(k, shape, scl):
        return scl * jax.random.normal(k, shape, dtype=jnp.float32)

    x = nrm(ks[0], (B, S, hidden), 1.0)
    params = dict(
        ln1_g=1.0 + nrm(ks[1], (L, 1, hidden), 0.1),
        ln1_b=nrm(ks[2], (L, 1, hidden), 0.1),
        wq=nrm(ks[3], (L, num_heads, head_dim, hidden), 0.2),
        wk=nrm(ks[4], (L, num_heads, head_dim, hidden), 0.2),
        wv=nrm(ks[5], (L, num_heads, head_dim, hidden), 0.2),
        bq=nrm(ks[6], (L, num_heads, 1, head_dim), 0.05),
        bk=nrm(ks[7], (L, num_heads, 1, head_dim), 0.05),
        bv=nrm(ks[8], (L, num_heads, 1, head_dim), 0.05),
        wo=nrm(ks[9], (L, num_heads, head_dim, hidden), 0.2),
        bo=nrm(ks[10], (L, 1, hidden), 0.05),
        ln2_g=1.0 + nrm(ks[11], (L, 1, hidden), 0.1),
        ln2_b=nrm(ks[12], (L, 1, hidden), 0.1),
        w1=nrm(ks[13], (L, hidden, inter), 0.2),
        b1=nrm(ks[14], (L, 1, inter), 0.05),
        w2=nrm(ks[15], (L, inter, hidden), 0.2),
        b2=nrm(ks[16], (L, 1, hidden), 0.05),
    )

    ref = _encoder_reference(x, params, num_heads=num_heads)

    # float32 exact path (exact softmax divide) — tight check against reference.
    out, attns = encoder_forward(x, params, num_heads=num_heads,
                                 compute_dtype=jnp.float32,
                                 batch_tile=1, approx_recip=False)
    out = jax.block_until_ready(out)
    assert out.shape == (B, S, hidden)
    assert attns is None
    assert jnp.allclose(out, ref, atol=1e-3, rtol=1e-3), \
        f"f32 max abs err {float(jnp.max(jnp.abs(out - ref)))}"

    # Default fast path: bf16 MXU weights, f32 residual/statistics, approximate
    # reciprocal softmax normalization.
    out_bf16, _ = encoder_forward(x, params, num_heads=num_heads,
                                  compute_dtype=jnp.bfloat16, batch_tile=1)
    out_bf16 = jax.block_until_ready(out_bf16)
    assert jnp.allclose(out_bf16, ref, atol=0.15, rtol=0.15), \
        f"bf16 max abs err {float(jnp.max(jnp.abs(out_bf16 - ref)))}"

    print("KERNEL_OK")
</pallas_src>

<mosaic_0001>
module attributes {stable_mosaic.version = 11 : i64} {
  func.func @_encoder_kernel(%arg0: i32, %arg1: i32, %arg2: memref<8x32xf32, #tpu.memory_space<vmem>>, %arg3: memref<1x1x32xf32, #tpu.memory_space<vmem>>, %arg4: memref<1x1x32xf32, #tpu.memory_space<vmem>>, %arg5: memref<1x32x96xf32, #tpu.memory_space<vmem>>, %arg6: memref<1x1x96xf32, #tpu.memory_space<vmem>>, %arg7: memref<1x32x32xf32, #tpu.memory_space<vmem>>, %arg8: memref<1x1x32xf32, #tpu.memory_space<vmem>>, %arg9: memref<1x1x32xf32, #tpu.memory_space<vmem>>, %arg10: memref<1x1x32xf32, #tpu.memory_space<vmem>>, %arg11: memref<1x32x64xf32, #tpu.memory_space<vmem>>, %arg12: memref<1x1x64xf32, #tpu.memory_space<vmem>>, %arg13: memref<1x64x32xf32, #tpu.memory_space<vmem>>, %arg14: memref<1x1x32xf32, #tpu.memory_space<vmem>>, %arg15: memref<8x32xf32, #tpu.memory_space<vmem>>, %arg16: memref<8x32xf32, #tpu.memory_space<vmem>>) attributes {dimension_semantics = [#tpu.dimension_semantics<parallel>, #tpu.dimension_semantics<arbitrary>], iteration_bounds = array<i64: 2, 2>, scalar_prefetch = 0 : i64, scratch_operands = 1 : i64, tpu.core_type = #tpu.core_type<tc>, window_params = [{transform_indices = @transform_0, window_bounds = array<i64: 8, 32>}, {transform_indices = @transform_1, window_bounds = array<i64: 1, 1, 32>}, {transform_indices = @transform_2, window_bounds = array<i64: 1, 1, 32>}, {transform_indices = @transform_3, window_bounds = array<i64: 1, 32, 96>}, {transform_indices = @transform_4, window_bounds = array<i64: 1, 1, 96>}, {transform_indices = @transform_5, window_bounds = array<i64: 1, 32, 32>}, {transform_indices = @transform_6, window_bounds = array<i64: 1, 1, 32>}, {transform_indices = @transform_7, window_bounds = array<i64: 1, 1, 32>}, {transform_indices = @transform_8, window_bounds = array<i64: 1, 1, 32>}, {transform_indices = @transform_9, window_bounds = array<i64: 1, 32, 64>}, {transform_indices = @transform_10, window_bounds = array<i64: 1, 1, 64>}, {transform_indices = @transform_11, window_bounds = array<i64: 1, 64, 32>}, {transform_indices = @transform_12, window_bounds = array<i64: 1, 1, 32>}, {transform_indices = @transform_13, window_bounds = array<i64: 8, 32>}]} {
    %c0_i32 = arith.constant 0 : i32
    %0 = arith.cmpi eq, %arg1, %c0_i32 : i32
    %1 = arith.extui %0 : i1 to i32
    %c0_i32_0 = arith.constant 0 : i32
    %2 = arith.cmpi ne, %1, %c0_i32_0 : i32
    scf.if %2 {
      %c0_74 = arith.constant 0 : index
      %c0_75 = arith.constant 0 : index
      %166 = vector.load %arg2[%c0_74, %c0_75] : memref<8x32xf32, #tpu.memory_space<vmem>>, vector<8x32xf32>
      %c0_76 = arith.constant 0 : index
      %c0_77 = arith.constant 0 : index
      %167 = vector.load %arg16[%c0_76, %c0_77] : memref<8x32xf32, #tpu.memory_space<vmem>>, vector<8x32xf32>
      tpu.vector_store %arg16[%c0_76, %c0_77], %166 {strides = array<i32>} : memref<8x32xf32, #tpu.memory_space<vmem>>, vector<8x32xf32>,
    } else {
    }
    %c0 = arith.constant 0 : index
    %c0_1 = arith.constant 0 : index
    %3 = vector.load %arg16[%c0, %c0_1] : memref<8x32xf32, #tpu.memory_space<vmem>>, vector<8x32xf32>
    %c0_2 = arith.constant 0 : index
    %c0_3 = arith.constant 0 : index
    %c0_4 = arith.constant 0 : index
    %4 = vector.load %arg3[%c0_2, %c0_3, %c0_4] : memref<1x1x32xf32, #tpu.memory_space<vmem>>, vector<1x1x32xf32>
    %5 = vector.shape_cast %4 : vector<1x1x32xf32> to vector<1x32xf32>
    %c0_5 = arith.constant 0 : index
    %c0_6 = arith.constant 0 : index
    %c0_7 = arith.constant 0 : index
    %6 = vector.load %arg4[%c0_5, %c0_6, %c0_7] : memref<1x1x32xf32, #tpu.memory_space<vmem>>, vector<1x1x32xf32>
    %7 = vector.shape_cast %6 : vector<1x1x32xf32> to vector<1x32xf32>
    %cst = arith.constant dense<0.000000e+00> : vector<8xf32>
    %8 = vector.multi_reduction <add>, %3, %cst [1] : vector<8x32xf32> to vector<8xf32>
    %9 = vector.shape_cast %8 : vector<8xf32> to vector<8x1xf32>
    %cst_8 = arith.constant 3.200000e+01 : f32
    %10 = vector.broadcast %cst_8 : f32 to vector<8x1xf32>
    %11 = arith.divf %9, %10 : vector<8x1xf32>
    %12 = vector.broadcast %11 : vector<8x1xf32> to vector<8x32xf32>
    %13 = arith.subf %3, %12 : vector<8x32xf32>
    %14 = arith.mulf %13, %13 : vector<8x32xf32>
    %cst_9 = arith.constant dense<0.000000e+00> : vector<8xf32>
    %15 = vector.multi_reduction <add>, %14, %cst_9 [1] : vector<8x32xf32> to vector<8xf32>
    %16 = vector.shape_cast %15 : vector<8xf32> to vector<8x1xf32>
    %cst_10 = arith.constant 3.200000e+01 : f32
    %17 = vector.broadcast %cst_10 : f32 to vector<8x1xf32>
    %18 = arith.divf %16, %17 : vector<8x1xf32>
    %cst_11 = arith.constant 9.99999974E-6 : f32
    %19 = vector.broadcast %cst_11 : f32 to vector<8x1xf32>
    %20 = arith.addf %18, %19 : vector<8x1xf32>
    %21 = math.rsqrt %20 : vector<8x1xf32>
    %22 = vector.broadcast %21 : vector<8x1xf32> to vector<8x32xf32>
    %23 = arith.mulf %13, %22 : vector<8x32xf32>
    %24 = vector.broadcast %5 : vector<1x32xf32> to vector<8x32xf32>
    %25 = arith.mulf %23, %24 : vector<8x32xf32>
    %26 = vector.broadcast %7 : vector<1x32xf32> to vector<8x32xf32>
    %27 = arith.addf %25, %26 : vector<8x32xf32>
    %c0_12 = arith.constant 0 : index
    %c0_13 = arith.constant 0 : index
    %c0_14 = arith.constant 0 : index
    %28 = vector.load %arg5[%c0_12, %c0_13, %c0_14] : memref<1x32x96xf32, #tpu.memory_space<vmem>>, vector<1x32x96xf32>
    %29 = vector.shape_cast %28 : vector<1x32x96xf32> to vector<32x96xf32>
    %cst_15 = arith.constant dense<0.000000e+00> : vector<8x96xf32>
    %30 = tpu.matmul %27, %29, %cst_15 {dimension_numbers = #tpu.dot_dimension_numbers<[1], [0], [0], [1], [0, 0, 1, 1], [], []>} : vector<8x32xf32>, vector<32x96xf32>, vector<8x96xf32> -> vector<8x96xf32>
    %c0_16 = arith.constant 0 : index
    %c0_17 = arith.constant 0 : index
    %c0_18 = arith.constant 0 : index
    %31 = vector.load %arg6[%c0_16, %c0_17, %c0_18] : memref<1x1x96xf32, #tpu.memory_space<vmem>>, vector<1x1x96xf32>
    %32 = vector.shape_cast %31 : vector<1x1x96xf32> to vector<1x96xf32>
    %33 = vector.broadcast %32 : vector<1x96xf32> to vector<8x96xf32>
    %34 = arith.addf %30, %33 : vector<8x96xf32>
    %35 = vector.extract_strided_slice %34 {offsets = [0, 0], sizes = [8, 32], strides = [1, 1]} : vector<8x96xf32> to vector<8x32xf32>
    %36 = vector.shape_cast %35 : vector<8x32xf32> to vector<1x8x32xf32>
    %37 = vector.extract_strided_slice %34 {offsets = [0, 32], sizes = [8, 32], strides = [1, 1]} : vector<8x96xf32> to vector<8x32xf32>
    %38 = vector.shape_cast %37 : vector<8x32xf32> to vector<1x8x32xf32>
    %39 = vector.extract_strided_slice %34 {offsets = [0, 64], sizes = [8, 32], strides = [1, 1]} : vector<8x96xf32> to vector<8x32xf32>
    %40 = vector.shape_cast %39 : vector<8x32xf32> to vector<1x8x32xf32>
    %41 = vector.extract_strided_slice %36 {offsets = [0, 0, 0], sizes = [1, 8, 8], strides = [1, 1, 1]} : vector<1x8x32xf32> to vector<1x8x8xf32>
    %42 = vector.extract_strided_slice %38 {offsets = [0, 0, 0], sizes = [1, 8, 8], strides = [1, 1, 1]} : vector<1x8x32xf32> to vector<1x8x8xf32>
    %43 = vector.extract_strided_slice %40 {offsets = [0, 0, 0], sizes = [1, 8, 8], strides = [1, 1, 1]} : vector<1x8x32xf32> to vector<1x8x8xf32>
    "tpu.trace_start"() <{level = 10 : i32, message = "bqd,bkd->bqk"}> : () -> ()
    %cst_19 = arith.constant dense<0.000000e+00> : vector<1x8x8xf32>
    %44 = tpu.matmul %41, %42, %cst_19 {dimension_numbers = #tpu.dot_dimension_numbers<[2], [2], [1], [1], [0, 0, 0, 1, 1, 1], [0], [0]>} : vector<1x8x8xf32>, vector<1x8x8xf32>, vector<1x8x8xf32> -> vector<1x8x8xf32>
    "tpu.trace_stop"() : () -> ()
    %cst_20 = arith.constant dense<0xFF800000> : vector<1x8xf32>
    %45 = vector.multi_reduction <maximumf>, %44, %cst_20 [2] : vector<1x8x8xf32> to vector<1x8xf32>
    %46 = vector.shape_cast %45 : vector<1x8xf32> to vector<1x8x1xf32>
    %47 = vector.broadcast %46 : vector<1x8x1xf32> to vector<1x8x8xf32>
    %48 = arith.subf %44, %47 : vector<1x8x8xf32>
    %49 = math.exp %48 : vector<1x8x8xf32>
    %cst_21 = arith.constant dense<0.000000e+00> : vector<1x8xf32>
    %50 = vector.multi_reduction <add>, %49, %cst_21 [2] : vector<1x8x8xf32> to vector<1x8xf32>
    %51 = vector.shape_cast %50 : vector<1x8xf32> to vector<1x8x1xf32>
    %52 = vector.broadcast %51 : vector<1x8x1xf32> to vector<1x8x8xf32>
    %53 = arith.divf %49, %52 : vector<1x8x8xf32>
    "tpu.trace_start"() <{level = 10 : i32, message = "bqk,bkd->bqd"}> : () -> ()
    %cst_22 = arith.constant dense<0.000000e+00> : vector<1x8x8xf32>
    %54 = tpu.matmul %53, %43, %cst_22 {dimension_numbers = #tpu.dot_dimension_numbers<[2], [1], [1], [2], [0, 0, 0, 1, 1, 2], [0], [0]>} : vector<1x8x8xf32>, vector<1x8x8xf32>, vector<1x8x8xf32> -> vector<1x8x8xf32>
    "tpu.trace_stop"() : () -> ()
    %55 = vector.shape_cast %54 : vector<1x8x8xf32> to vector<8x8xf32>
    %56 = vector.extract_strided_slice %36 {offsets = [0, 0, 8], sizes = [1, 8, 8], strides = [1, 1, 1]} : vector<1x8x32xf32> to vector<1x8x8xf32>
    %57 = vector.extract_strided_slice %38 {offsets = [0, 0, 8], sizes = [1, 8, 8], strides = [1, 1, 1]} : vector<1x8x32xf32> to vector<1x8x8xf32>
    %58 = vector.extract_strided_slice %40 {offsets = [0, 0, 8], sizes = [1, 8, 8], strides = [1, 1, 1]} : vector<1x8x32xf32> to vector<1x8x8xf32>
    "tpu.trace_start"() <{level = 10 : i32, message = "bqd,bkd->bqk"}> : () -> ()
    %cst_23 = arith.constant dense<0.000000e+00> : vector<1x8x8xf32>
    %59 = tpu.matmul %56, %57, %cst_23 {dimension_numbers = #tpu.dot_dimension_numbers<[2], [2], [1], [1], [0, 0, 0, 1, 1, 1], [0], [0]>} : vector<1x8x8xf32>, vector<1x8x8xf32>, vector<1x8x8xf32> -> vector<1x8x8xf32>
    "tpu.trace_stop"() : () -> ()
    %cst_24 = arith.constant dense<0xFF800000> : vector<1x8xf32>
    %60 = vector.multi_reduction <maximumf>, %59, %cst_24 [2] : vector<1x8x8xf32> to vector<1x8xf32>
    %61 = vector.shape_cast %60 : vector<1x8xf32> to vector<1x8x1xf32>
    %62 = vector.broadcast %61 : vector<1x8x1xf32> to vector<1x8x8xf32>
    %63 = arith.subf %59, %62 : vector<1x8x8xf32>
    %64 = math.exp %63 : vector<1x8x8xf32>
    %cst_25 = arith.constant dense<0.000000e+00> : vector<1x8xf32>
    %65 = vector.multi_reduction <add>, %64, %cst_25 [2] : vector<1x8x8xf32> to vector<1x8xf32>
    %66 = vector.shape_cast %65 : vector<1x8xf32> to vector<1x8x1xf32>
    %67 = vector.broadcast %66 : vector<1x8x1xf32> to vector<1x8x8xf32>
    %68 = arith.divf %64, %67 : vector<1x8x8xf32>
    "tpu.trace_start"() <{level = 10 : i32, message = "bqk,bkd->bqd"}> : () -> ()
    %cst_26 = arith.constant dense<0.000000e+00> : vector<1x8x8xf32>
    %69 = tpu.matmul %68, %58, %cst_26 {dimension_numbers = #tpu.dot_dimension_numbers<[2], [1], [1], [2], [0, 0, 0, 1, 1, 2], [0], [0]>} : vector<1x8x8xf32>, vector<1x8x8xf32>, vector<1x8x8xf32> -> vector<1x8x8xf32>
    "tpu.trace_stop"() : () -> ()
    %70 = vector.shape_cast %69 : vector<1x8x8xf32> to vector<8x8xf32>
    %71 = vector.extract_strided_slice %36 {offsets = [0, 0, 16], sizes = [1, 8, 8], strides = [1, 1, 1]} : vector<1x8x32xf32> to vector<1x8x8xf32>
    %72 = vector.extract_strided_slice %38 {offsets = [0, 0, 16], sizes = [1, 8, 8], strides = [1, 1, 1]} : vector<1x8x32xf32> to vector<1x8x8xf32>
    %73 = vector.extract_strided_slice %40 {offsets = [0, 0, 16], sizes = [1, 8, 8], strides = [1, 1, 1]} : vector<1x8x32xf32> to vector<1x8x8xf32>
    "tpu.trace_start"() <{level = 10 : i32, message = "bqd,bkd->bqk"}> : () -> ()
    %cst_27 = arith.constant dense<0.000000e+00> : vector<1x8x8xf32>
    %74 = tpu.matmul %71, %72, %cst_27 {dimension_numbers = #tpu.dot_dimension_numbers<[2], [2], [1], [1], [0, 0, 0, 1, 1, 1], [0], [0]>} : vector<1x8x8xf32>, vector<1x8x8xf32>, vector<1x8x8xf32> -> vector<1x8x8xf32>
    "tpu.trace_stop"() : () -> ()
    %cst_28 = arith.constant dense<0xFF800000> : vector<1x8xf32>
    %75 = vector.multi_reduction <maximumf>, %74, %cst_28 [2] : vector<1x8x8xf32> to vector<1x8xf32>
    %76 = vector.shape_cast %75 : vector<1x8xf32> to vector<1x8x1xf32>
    %77 = vector.broadcast %76 : vector<1x8x1xf32> to vector<1x8x8xf32>
    %78 = arith.subf %74, %77 : vector<1x8x8xf32>
    %79 = math.exp %78 : vector<1x8x8xf32>
    %cst_29 = arith.constant dense<0.000000e+00> : vector<1x8xf32>
    %80 = vector.multi_reduction <add>, %79, %cst_29 [2] : vector<1x8x8xf32> to vector<1x8xf32>
    %81 = vector.shape_cast %80 : vector<1x8xf32> to vector<1x8x1xf32>
    %82 = vector.broadcast %81 : vector<1x8x1xf32> to vector<1x8x8xf32>
    %83 = arith.divf %79, %82 : vector<1x8x8xf32>
    "tpu.trace_start"() <{level = 10 : i32, message = "bqk,bkd->bqd"}> : () -> ()
    %cst_30 = arith.constant dense<0.000000e+00> : vector<1x8x8xf32>
    %84 = tpu.matmul %83, %73, %cst_30 {dimension_numbers = #tpu.dot_dimension_numbers<[2], [1], [1], [2], [0, 0, 0, 1, 1, 2], [0], [0]>} : vector<1x8x8xf32>, vector<1x8x8xf32>, vector<1x8x8xf32> -> vector<1x8x8xf32>
    "tpu.trace_stop"() : () -> ()
    %85 = vector.shape_cast %84 : vector<1x8x8xf32> to vector<8x8xf32>
    %86 = vector.extract_strided_slice %36 {offsets = [0, 0, 24], sizes = [1, 8, 8], strides = [1, 1, 1]} : vector<1x8x32xf32> to vector<1x8x8xf32>
    %87 = vector.extract_strided_slice %38 {offsets = [0, 0, 24], sizes = [1, 8, 8], strides = [1, 1, 1]} : vector<1x8x32xf32> to vector<1x8x8xf32>
    %88 = vector.extract_strided_slice %40 {offsets = [0, 0, 24], sizes = [1, 8, 8], strides = [1, 1, 1]} : vector<1x8x32xf32> to vector<1x8x8xf32>
    "tpu.trace_start"() <{level = 10 : i32, message = "bqd,bkd->bqk"}> : () -> ()
    %cst_31 = arith.constant dense<0.000000e+00> : vector<1x8x8xf32>
    %89 = tpu.matmul %86, %87, %cst_31 {dimension_numbers = #tpu.dot_dimension_numbers<[2], [2], [1], [1], [0, 0, 0, 1, 1, 1], [0], [0]>} : vector<1x8x8xf32>, vector<1x8x8xf32>, vector<1x8x8xf32> -> vector<1x8x8xf32>
    "tpu.trace_stop"() : () -> ()
    %cst_32 = arith.constant dense<0xFF800000> : vector<1x8xf32>
    %90 = vector.multi_reduction <maximumf>, %89, %cst_32 [2] : vector<1x8x8xf32> to vector<1x8xf32>
    %91 = vector.shape_cast %90 : vector<1x8xf32> to vector<1x8x1xf32>
    %92 = vector.broadcast %91 : vector<1x8x1xf32> to vector<1x8x8xf32>
    %93 = arith.subf %89, %92 : vector<1x8x8xf32>
    %94 = math.exp %93 : vector<1x8x8xf32>
    %cst_33 = arith.constant dense<0.000000e+00> : vector<1x8xf32>
    %95 = vector.multi_reduction <add>, %94, %cst_33 [2] : vector<1x8x8xf32> to vector<1x8xf32>
    %96 = vector.shape_cast %95 : vector<1x8xf32> to vector<1x8x1xf32>
    %97 = vector.broadcast %96 : vector<1x8x1xf32> to vector<1x8x8xf32>
    %98 = arith.divf %94, %97 : vector<1x8x8xf32>
    "tpu.trace_start"() <{level = 10 : i32, message = "bqk,bkd->bqd"}> : () -> ()
    %cst_34 = arith.constant dense<0.000000e+00> : vector<1x8x8xf32>
    %99 = tpu.matmul %98, %88, %cst_34 {dimension_numbers = #tpu.dot_dimension_numbers<[2], [1], [1], [2], [0, 0, 0, 1, 1, 2], [0], [0]>} : vector<1x8x8xf32>, vector<1x8x8xf32>, vector<1x8x8xf32> -> vector<1x8x8xf32>
    "tpu.trace_stop"() : () -> ()
    %100 = vector.shape_cast %99 : vector<1x8x8xf32> to vector<8x8xf32>
    %101 = tpu.concatenate %55, %70, %85, %100 in 1 : vector<8x8xf32>, vector<8x8xf32>, vector<8x8xf32>, vector<8x8xf32> -> vector<8x32xf32>
    %c0_35 = arith.constant 0 : index
    %c0_36 = arith.constant 0 : index
    %c0_37 = arith.constant 0 : index
    %102 = vector.load %arg7[%c0_35, %c0_36, %c0_37] : memref<1x32x32xf32, #tpu.memory_space<vmem>>, vector<1x32x32xf32>
    %103 = vector.shape_cast %102 : vector<1x32x32xf32> to vector<32x32xf32>
    %cst_38 = arith.constant dense<0.000000e+00> : vector<8x32xf32>
    %104 = tpu.matmul %101, %103, %cst_38 {dimension_numbers = #tpu.dot_dimension_numbers<[1], [0], [0], [1], [0, 0, 1, 1], [], []>} : vector<8x32xf32>, vector<32x32xf32>, vector<8x32xf32> -> vector<8x32xf32>
    %c0_39 = arith.constant 0 : index
    %c0_40 = arith.constant 0 : index
    %c0_41 = arith.constant 0 : index
    %105 = vector.load %arg8[%c0_39, %c0_40, %c0_41] : memref<1x1x32xf32, #tpu.memory_space<vmem>>, vector<1x1x32xf32>
    %106 = vector.shape_cast %105 : vector<1x1x32xf32> to vector<1x32xf32>
    %107 = vector.broadcast %106 : vector<1x32xf32> to vector<8x32xf32>
    %108 = arith.addf %104, %107 : vector<8x32xf32>
    %109 = arith.addf %3, %108 : vector<8x32xf32>
    %c0_42 = arith.constant 0 : index
    %c0_43 = arith.constant 0 : index
    %c0_44 = arith.constant 0 : index
    %110 = vector.load %arg9[%c0_42, %c0_43, %c0_44] : memref<1x1x32xf32, #tpu.memory_space<vmem>>, vector<1x1x32xf32>
    %111 = vector.shape_cast %110 : vector<1x1x32xf32> to vector<1x32xf32>
    %c0_45 = arith.constant 0 : index
    %c0_46 = arith.constant 0 : index
    %c0_47 = arith.constant 0 : index
    %112 = vector.load %arg10[%c0_45, %c0_46, %c0_47] : memref<1x1x32xf32, #tpu.memory_space<vmem>>, vector<1x1x32xf32>
    %113 = vector.shape_cast %112 : vector<1x1x32xf32> to vector<1x32xf32>
    %cst_48 = arith.constant dense<0.000000e+00> : vector<8xf32>
    %114 = vector.multi_reduction <add>, %109, %cst_48 [1] : vector<8x32xf32> to vector<8xf32>
    %115 = vector.shape_cast %114 : vector<8xf32> to vector<8x1xf32>
    %cst_49 = arith.constant 3.200000e+01 : f32
    %116 = vector.broadcast %cst_49 : f32 to vector<8x1xf32>
    %117 = arith.divf %115, %116 : vector<8x1xf32>
    %118 = vector.broadcast %117 : vector<8x1xf32> to vector<8x32xf32>
    %119 = arith.subf %109, %118 : vector<8x32xf32>
    %120 = arith.mulf %119, %119 : vector<8x32xf32>
    %cst_50 = arith.constant dense<0.000000e+00> : vector<8xf32>
    %121 = vector.multi_reduction <add>, %120, %cst_50 [1] : vector<8x32xf32> to vector<8xf32>
    %122 = vector.shape_cast %121 : vector<8xf32> to vector<8x1xf32>
    %cst_51 = arith.constant 3.200000e+01 : f32
    %123 = vector.broadcast %cst_51 : f32 to vector<8x1xf32>
    %124 = arith.divf %122, %123 : vector<8x1xf32>
    %cst_52 = arith.constant 9.99999974E-6 : f32
    %125 = vector.broadcast %cst_52 : f32 to vector<8x1xf32>
    %126 = arith.addf %124, %125 : vector<8x1xf32>
    %127 = math.rsqrt %126 : vector<8x1xf32>
    %128 = vector.broadcast %127 : vector<8x1xf32> to vector<8x32xf32>
    %129 = arith.mulf %119, %128 : vector<8x32xf32>
    %130 = vector.broadcast %111 : vector<1x32xf32> to vector<8x32xf32>
    %131 = arith.mulf %129, %130 : vector<8x32xf32>
    %132 = vector.broadcast %113 : vector<1x32xf32> to vector<8x32xf32>
    %133 = arith.addf %131, %132 : vector<8x32xf32>
    %c0_53 = arith.constant 0 : index
    %c0_54 = arith.constant 0 : index
    %c0_55 = arith.constant 0 : index
    %134 = vector.load %arg11[%c0_53, %c0_54, %c0_55] : memref<1x32x64xf32, #tpu.memory_space<vmem>>, vector<1x32x64xf32>
    %135 = vector.shape_cast %134 : vector<1x32x64xf32> to vector<32x64xf32>
    %cst_56 = arith.constant dense<0.000000e+00> : vector<8x64xf32>
    %136 = tpu.matmul %133, %135, %cst_56 {dimension_numbers = #tpu.dot_dimension_numbers<[1], [0], [0], [1], [0, 0, 1, 1], [], []>} : vector<8x32xf32>, vector<32x64xf32>, vector<8x64xf32> -> vector<8x64xf32>
    %c0_57 = arith.constant 0 : index
    %c0_58 = arith.constant 0 : index
    %c0_59 = arith.constant 0 : index
    %137 = vector.load %arg12[%c0_57, %c0_58, %c0_59] : memref<1x1x64xf32, #tpu.memory_space<vmem>>, vector<1x1x64xf32>
    %138 = vector.shape_cast %137 : vector<1x1x64xf32> to vector<1x64xf32>
    %139 = vector.broadcast %138 : vector<1x64xf32> to vector<8x64xf32>
    %140 = arith.addf %136, %139 : vector<8x64xf32>
    %cst_60 = arith.constant 5.000000e-01 : f32
    %141 = vector.broadcast %cst_60 : f32 to vector<8x64xf32>
    %142 = arith.mulf %141, %140 : vector<8x64xf32>
    %cst_61 = arith.constant 4.471500e-02 : f32
    %143 = vector.broadcast %cst_61 : f32 to vector<8x64xf32>
    %144 = arith.mulf %143, %140 : vector<8x64xf32>
    %145 = arith.mulf %144, %140 : vector<8x64xf32>
    %146 = arith.mulf %145, %140 : vector<8x64xf32>
    %147 = arith.addf %140, %146 : vector<8x64xf32>
    %cst_62 = arith.constant 0.797884583 : f32
    %148 = vector.broadcast %cst_62 : f32 to vector<8x64xf32>
    %149 = arith.mulf %148, %147 : vector<8x64xf32>
    %150 = math.tanh %149 : vector<8x64xf32>
    %cst_63 = arith.constant 1.000000e+00 : f32
    %151 = vector.broadcast %cst_63 : f32 to vector<8x64xf32>
    %152 = arith.addf %151, %150 : vector<8x64xf32>
    %153 = arith.mulf %142, %152 : vector<8x64xf32>
    %c0_64 = arith.constant 0 : index
    %c0_65 = arith.constant 0 : index
    %c0_66 = arith.constant 0 : index
    %154 = vector.load %arg13[%c0_64, %c0_65, %c0_66] : memref<1x64x32xf32, #tpu.memory_space<vmem>>, vector<1x64x32xf32>
    %155 = vector.shape_cast %154 : vector<1x64x32xf32> to vector<64x32xf32>
    %cst_67 = arith.constant dense<0.000000e+00> : vector<8x32xf32>
    %156 = tpu.matmul %153, %155, %cst_67 {dimension_numbers = #tpu.dot_dimension_numbers<[1], [0], [0], [1], [0, 0, 1, 1], [], []>} : vector<8x64xf32>, vector<64x32xf32>, vector<8x32xf32> -> vector<8x32xf32>
    %c0_68 = arith.constant 0 : index
    %c0_69 = arith.constant 0 : index
    %c0_70 = arith.constant 0 : index
    %157 = vector.load %arg14[%c0_68, %c0_69, %c0_70] : memref<1x1x32xf32, #tpu.memory_space<vmem>>, vector<1x1x32xf32>
    %158 = vector.shape_cast %157 : vector<1x1x32xf32> to vector<1x32xf32>
    %159 = vector.broadcast %158 : vector<1x32xf32> to vector<8x32xf32>
    %160 = arith.addf %156, %159 : vector<8x32xf32>
    %161 = arith.addf %109, %160 : vector<8x32xf32>
    %c0_71 = arith.constant 0 : index
    %c0_72 = arith.constant 0 : index
    %162 = vector.load %arg16[%c0_71, %c0_72] : memref<8x32xf32, #tpu.memory_space<vmem>>, vector<8x32xf32>
    tpu.vector_store %arg16[%c0_71, %c0_72], %161 {strides = array<i32>} : memref<8x32xf32, #tpu.memory_space<vmem>>, vector<8x32xf32>,
    %c1_i32 = arith.constant 1 : i32
    %163 = arith.cmpi eq, %arg1, %c1_i32 : i32
    %164 = arith.extui %163 : i1 to i32
    %c0_i32_73 = arith.constant 0 : i32
    %165 = arith.cmpi ne, %164, %c0_i32_73 : i32
    scf.if %165 {
      %c0_74 = arith.constant 0 : index
      %c0_75 = arith.constant 0 : index
      %166 = vector.load %arg15[%c0_74, %c0_75] : memref<8x32xf32, #tpu.memory_space<vmem>>, vector<8x32xf32>
      tpu.vector_store %arg15[%c0_74, %c0_75], %161 {strides = array<i32>} : memref<8x32xf32, #tpu.memory_space<vmem>>, vector<8x32xf32>,
    } else {
    }
    return
  }
  func.func @transform_0(%arg0: i32, %arg1: i32) -> (i32, i32) {
    %c0_i32 = arith.constant 0 : i32
    %c0_i32_0 = arith.constant 0 : i32
    return %arg0, %c0_i32 : i32, i32
  }
  func.func @transform_1(%arg0: i32, %arg1: i32) -> (i32, i32, i32) {
    %c0_i32 = arith.constant 0 : i32
    %c0_i32_0 = arith.constant 0 : i32
    %c0_i32_1 = arith.constant 0 : i32
    return %arg1, %c0_i32, %c0_i32_0 : i32, i32, i32
  }
  func.func @transform_2(%arg0: i32, %arg1: i32) -> (i32, i32, i32) {
    %c0_i32 = arith.constant 0 : i32
    %c0_i32_0 = arith.constant 0 : i32
    %c0_i32_1 = arith.constant 0 : i32
    return %arg1, %c0_i32, %c0_i32_0 : i32, i32, i32
  }
  func.func @transform_3(%arg0: i32, %arg1: i32) -> (i32, i32, i32) {
    %c0_i32 = arith.constant 0 : i32
    %c0_i32_0 = arith.constant 0 : i32
    %c0_i32_1 = arith.constant 0 : i32
    return %arg1, %c0_i32, %c0_i32_0 : i32, i32, i32
  }
  func.func @transform_4(%arg0: i32, %arg1: i32) -> (i32, i32, i32) {
    %c0_i32 = arith.constant 0 : i32
    %c0_i32_0 = arith.constant 0 : i32
    %c0_i32_1 = arith.constant 0 : i32
    return %arg1, %c0_i32, %c0_i32_0 : i32, i32, i32
  }
  func.func @transform_5(%arg0: i32, %arg1: i32) -> (i32, i32, i32) {
    %c0_i32 = arith.constant 0 : i32
    %c0_i32_0 = arith.constant 0 : i32
    %c0_i32_1 = arith.constant 0 : i32
    return %arg1, %c0_i32, %c0_i32_0 : i32, i32, i32
  }
  func.func @transform_6(%arg0: i32, %arg1: i32) -> (i32, i32, i32) {
    %c0_i32 = arith.constant 0 : i32
    %c0_i32_0 = arith.constant 0 : i32
    %c0_i32_1 = arith.constant 0 : i32
    return %arg1, %c0_i32, %c0_i32_0 : i32, i32, i32
  }
  func.func @transform_7(%arg0: i32, %arg1: i32) -> (i32, i32, i32) {
    %c0_i32 = arith.constant 0 : i32
    %c0_i32_0 = arith.constant 0 : i32
    %c0_i32_1 = arith.constant 0 : i32
    return %arg1, %c0_i32, %c0_i32_0 : i32, i32, i32
  }
  func.func @transform_8(%arg0: i32, %arg1: i32) -> (i32, i32, i32) {
    %c0_i32 = arith.constant 0 : i32
    %c0_i32_0 = arith.constant 0 : i32
    %c0_i32_1 = arith.constant 0 : i32
    return %arg1, %c0_i32, %c0_i32_0 : i32, i32, i32
  }
  func.func @transform_9(%arg0: i32, %arg1: i32) -> (i32, i32, i32) {
    %c0_i32 = arith.constant 0 : i32
    %c0_i32_0 = arith.constant 0 : i32
    %c0_i32_1 = arith.constant 0 : i32
    return %arg1, %c0_i32, %c0_i32_0 : i32, i32, i32
  }
  func.func @transform_10(%arg0: i32, %arg1: i32) -> (i32, i32, i32) {
    %c0_i32 = arith.constant 0 : i32
    %c0_i32_0 = arith.constant 0 : i32
    %c0_i32_1 = arith.constant 0 : i32
    return %arg1, %c0_i32, %c0_i32_0 : i32, i32, i32
  }
  func.func @transform_11(%arg0: i32, %arg1: i32) -> (i32, i32, i32) {
    %c0_i32 = arith.constant 0 : i32
    %c0_i32_0 = arith.constant 0 : i32
    %c0_i32_1 = arith.constant 0 : i32
    return %arg1, %c0_i32, %c0_i32_0 : i32, i32, i32
  }
  func.func @transform_12(%arg0: i32, %arg1: i32) -> (i32, i32, i32) {
    %c0_i32 = arith.constant 0 : i32
    %c0_i32_0 = arith.constant 0 : i32
    %c0_i32_1 = arith.constant 0 : i32
    return %arg1, %c0_i32, %c0_i32_0 : i32, i32, i32
  }
  func.func @transform_13(%arg0: i32, %arg1: i32) -> (i32, i32) {
    %c0_i32 = arith.constant 0 : i32
    %c0_i32_0 = arith.constant 0 : i32
    return %arg0, %c0_i32 : i32, i32
  }
}

</mosaic_0001>

<llo_original>
// kernel: tpu_custom_call.1
$region0: #{tpu_custom_call.1}
  #allocation0 [shape = 'u32[]', space=smem, size = 0x4, offset = 0x4, fixed_abs, tag = 'smem constant byte address 0x4 - core index']
  #allocation1 [shape = 'u32[144,128]{1,0:T(1,128)}', space=vmem, size = 0x12000, scoped, tag = 'internal scratch']
  #allocation2 [shape = 'f32[8,32]{1,0:T(8,128)}', space=vmem, size = 0x1000, scoped, tag = 'scratch operand']
  %s0 = inlined_call_operand.hbm [shape: f32[16,32], index: 0, kind: input, shape index: {}]
  %s1 = inlined_call_operand.hbm [shape: f32[2,1,32], index: 1, kind: input, shape index: {}]
  %s2 = inlined_call_operand.hbm [shape: f32[2,1,32], index: 2, kind: input, shape index: {}]
  %s3 = inlined_call_operand.hbm [shape: f32[2,32,96], index: 3, kind: input, shape index: {}]
  %s4 = inlined_call_operand.hbm [shape: f32[2,1,96], index: 4, kind: input, shape index: {}]
  %s5 = inlined_call_operand.hbm [shape: f32[2,32,32], index: 5, kind: input, shape index: {}]
  %s6 = inlined_call_operand.hbm [shape: f32[2,1,32], index: 6, kind: input, shape index: {}]
  %s7 = inlined_call_operand.hbm [shape: f32[2,1,32], index: 7, kind: input, shape index: {}]
  %s8 = inlined_call_operand.hbm [shape: f32[2,1,32], index: 8, kind: input, shape index: {}]
  %s9 = inlined_call_operand.hbm [shape: f32[2,32,64], index: 9, kind: input, shape index: {}]
  %s10 = inlined_call_operand.hbm [shape: f32[2,1,64], index: 10, kind: input, shape index: {}]
  %s11 = inlined_call_operand.hbm [shape: f32[2,64,32], index: 11, kind: input, shape index: {}]
  %s12 = inlined_call_operand.hbm [shape: f32[2,1,32], index: 12, kind: input, shape index: {}]
  %s13 = inlined_call_operand.hbm [shape: f32[16,32], index: 13, kind: output, shape index: {}]
  %s14 = sld [smem:[#allocation0]]
  $region145: #{tpu_custom_call.1} parent=0
    _
  %s16 = ssub.s32 1, %s14
  %s17 = scalar_select 0, %s16, %s14
  $region1: #{tpu_custom_call.1} parent=0
    #allocation3 [shape = 'u8[8192]{0}', space=vmem, size = 0x2000, scoped, tag = 'input window, operand 0']
    #allocation4 [shape = 's32[2]{0}', space=sflag, size = 0x8, scoped, tag = 'scoped memory for tpu_custom_call.1']
    #allocation5 [shape = 's32[2]{0}', space=sflag, size = 0x8, scoped, tag = 'scoped memory for tpu_custom_call.1']
    #allocation6 [shape = 'u8[1024]{0}', space=vmem, size = 0x400, scoped, tag = 'input window, operand 1']
    #allocation7 [shape = 's32[2]{0}', space=sflag, size = 0x8, scoped, tag = 'scoped memory for tpu_custom_call.1']
    #allocation8 [shape = 'u8[1024]{0}', space=vmem, size = 0x400, scoped, tag = 'input window, operand 2']
    #allocation9 [shape = 'u8[32768]{0}', space=vmem, size = 0x8000, scoped, tag = 'input window, operand 3']
    #allocation10 [shape = 's32[2]{0}', space=sflag, size = 0x8, scoped, tag = 'scoped memory for tpu_custom_call.1']
    #allocation11 [shape = 'u8[1024]{0}', space=vmem, size = 0x400, scoped, tag = 'input window, operand 4']
    #allocation12 [shape = 'u8[32768]{0}', space=vmem, size = 0x8000, scoped, tag = 'input window, operand 5']
    #allocation13 [shape = 's32[2]{0}', space=sflag, size = 0x8, scoped, tag = 'scoped memory for tpu_custom_call.1']
    #allocation14 [shape = 'u8[1024]{0}', space=vmem, size = 0x400, scoped, tag = 'input window, operand 6']
    #allocation15 [shape = 'u8[1024]{0}', space=vmem, size = 0x400, scoped, tag = 'input window, operand 7']
    #allocation16 [shape = 's32[2]{0}', space=sflag, size = 0x8, scoped, tag = 'scoped memory for tpu_custom_call.1']
    #allocation17 [shape = 'u8[1024]{0}', space=vmem, size = 0x400, scoped, tag = 'input window, operand 8']
    #allocation18 [shape = 'u8[32768]{0}', space=vmem, size = 0x8000, scoped, tag = 'input window, operand 9']
    #allocation19 [shape = 's32[2]{0}', space=sflag, size = 0x8, scoped, tag = 'scoped memory for tpu_custom_call.1']
    #allocation20 [shape = 'u8[1024]{0}', space=vmem, size = 0x400, scoped, tag = 'input window, operand 10']
    #allocation21 [shape = 'u8[65536]{0}', space=vmem, size = 0x10000, scoped, tag = 'input window, operand 11']
    #allocation22 [shape = 's32[2]{0}', space=sflag, size = 0x8, scoped, tag = 'scoped memory for tpu_custom_call.1']
    #allocation23 [shape = 'u8[1024]{0}', space=vmem, size = 0x400, scoped, tag = 'input window, operand 12']
    #allocation24 [shape = 'u8[8192]{0}', space=vmem, size = 0x2000, scoped, tag = 'output window, operand 0']
    %18 = vsyncpa [#allocation4], 0
    %s19 = scalar_lea.sflag [#allocation4], 1
    %20 = vsyncpa %s19, 0
    %21 = vsyncpa [#allocation7], 0
    %s22 = scalar_lea.sflag [#allocation7], 1
    %23 = vsyncpa %s22, 0
    %24 = vsyncpa [#allocation10], 0
    %s25 = scalar_lea.sflag [#allocation10], 1
    %26 = vsyncpa %s25, 0
    %27 = vsyncpa [#allocation13], 0
    %s28 = scalar_lea.sflag [#allocation13], 1
    %29 = vsyncpa %s28, 0
    %30 = vsyncpa [#allocation16], 0
    %s31 = scalar_lea.sflag [#allocation16], 1
    %32 = vsyncpa %s31, 0
    %33 = vsyncpa [#allocation19], 0
    %s34 = scalar_lea.sflag [#allocation19], 1
    %35 = vsyncpa %s34, 0
    %36 = vsyncpa [#allocation22], 0
    %s37 = scalar_lea.sflag [#allocation22], 1
    %38 = vsyncpa %s37, 0
    %39 = vsyncpa [#allocation5], 0
    %s40 = scalar_lea.sflag [#allocation5], 1
    %41 = vsyncpa %s40, 0
    loop: start=0, step=1, limit=6
    $region2: #{tpu_custom_call.1} parent=1 // loop_pre_header
      _
    $region3: #{tpu_custom_call.1} parent=1 // loop_header
      %s43 = sphi 0, %s47
      %p44 = scmp.ge.s32.totalorder %s43, 6
      %s50 = sphi 0, %s62
      %s51 = sphi 0, %s58
      %s52 = sphi 0, %s50
      %s53 = sphi 0, %s51
      %s54 = sphi 0, %s52
      %s55 = sphi 0, %s53
      %s65 = sphi 0, %s67
      %s68 = sphi 0, %s65
      %s69 = sphi 0, %s68
      %s85 = sphi 0, %s69
      %s91 = sphi 0, %s93
      %s94 = sphi 0, %s91
      %s95 = sphi 0, %s94
      %s111 = sphi 0, %s95
      %s117 = sphi 0, %s119
      %s120 = sphi 0, %s117
      %s121 = sphi 0, %s120
      %s137 = sphi 0, %s121
      %s143 = sphi 0, %s145
      %s146 = sphi 0, %s143
      %s147 = sphi 0, %s146
      %s163 = sphi 0, %s147
      %s169 = sphi 0, %s171
      %s172 = sphi 0, %s169
      %s173 = sphi 0, %s172
      %s189 = sphi 0, %s173
      %s195 = sphi 0, %s197
      %s198 = sphi 0, %s195
      %s199 = sphi 0, %s198
      %s215 = sphi 0, %s199
      %s221 = sphi 0, %s223
      %s224 = sphi 0, %s221
      %s225 = sphi 0, %s224
      %s241 = sphi 0, %s225
      %s247 = sphi 0, %s249
      %s250 = sphi 0, %s247
      %s251 = sphi 0, %s250
      %s267 = sphi 0, %s251
      %s273 = sphi 0, %s275
      %s276 = sphi 0, %s273
      %s277 = sphi 0, %s276
      %s293 = sphi 0, %s277
      %s299 = sphi 0, %s301
      %s302 = sphi 0, %s299
      %s303 = sphi 0, %s302
      %s319 = sphi 0, %s303
      %s325 = sphi 0, %s327
      %s328 = sphi 0, %s325
      %s329 = sphi 0, %s328
      %s345 = sphi 0, %s329
      %s351 = sphi 0, %s353
      %s354 = sphi 0, %s351
      %s355 = sphi 0, %s354
      %s371 = sphi 0, %s355
      %s377 = sphi 0, %s379
      %s380 = sphi 0, %s377
      %s381 = sphi 0, %s380
      %s397 = sphi 0, %s381
      %s403 = sphi 0, %s405
      %s406 = sphi 0, %s403
      %s407 = sphi 0, %s406
      %s423 = sphi 0, %s407
    $region4: #{tpu_custom_call.1} parent=1 // loop_header_branch
      %46 = sbr.rel (%p44) target = $region8
    $region5: #{tpu_custom_call.1} parent=1 // loop_body
      %s48 = ssub.s32 %s43, 1
      %s49 = ssub.s32 %s43, 2
      %s56 = sadd.s32 1, %s51
      %p57 = scmp.ge.s32.totalorder %s56, 2
      %s58 = scalar_select %p57, 0, %s56
      %s59 = sadd.s32 1, %s50
      %s60 = scalar_select %p57, %s59, %s50
      %p61 = scmp.ge.s32.totalorder %s60, 2
      %s62 = scalar_select %p61, 0, %s60
      %s63 = ssub.s32 %s50, %s62
      %p64 = scmp.eq.s32.totalorder %s63, 0
      %s66 = sadd.s32 %s65, 1
      %s67 = scalar_select %p64, %s65, %s66
      %p70 = pneg %p64
      %p71 = scmp.eq.s32.totalorder %s43, 3
      %p72 = por %p70, %p71
      %p73 = scmp.ne.s32.totalorder %s65, %s68
      %p74 = scmp.eq.s32.totalorder %s43, 0
      %p75 = por %p73, %p74
      %p76 = scmp.ne.s32.totalorder %s65, %s68
      %p77 = scmp.eq.s32.totalorder %s48, 3
      %p78 = por %p76, %p77
      %p79 = scmp.ne.s32.totalorder %s68, %s69
      %p80 = scmp.eq.s32.totalorder %s48, 0
      %p81 = por %p79, %p80
      %p82 = scmp.ne.s32.totalorder %s68, %s69
      %p83 = scmp.eq.s32.totalorder %s49, 3
      %p84 = por %p82, %p83
      %p86 = scmp.ne.s32.totalorder %s69, %s85
      %p87 = scmp.eq.s32.totalorder %s49, 0
      %p88 = por %p86, %p87
      %s89 = ssub.s32 %s51, %s58
      %p90 = scmp.eq.s32.totalorder %s89, 0
      %s92 = sadd.s32 %s91, 1
      %s93 = scalar_select %p90, %s91, %s92
      %p96 = pneg %p90
      %p97 = scmp.eq.s32.totalorder %s43, 3
      %p98 = por %p96, %p97
      %p99 = scmp.ne.s32.totalorder %s91, %s94
      %p100 = scmp.eq.s32.totalorder %s43, 0
      %p101 = por %p99, %p100
      %p102 = scmp.ne.s32.totalorder %s91, %s94
      %p103 = scmp.eq.s32.totalorder %s48, 3
      %p104 = por %p102, %p103
      %p105 = scmp.ne.s32.totalorder %s94, %s95
      %p106 = scmp.eq.s32.totalorder %s48, 0
      %p107 = por %p105, %p106
      %p108 = scmp.ne.s32.totalorder %s94, %s95
      %p109 = scmp.eq.s32.totalorder %s49, 3
      %p110 = por %p108, %p109
      %p112 = scmp.ne.s32.totalorder %s95, %s111
      %p113 = scmp.eq.s32.totalorder %s49, 0
      %p114 = por %p112, %p113
      %s115 = ssub.s32 %s51, %s58
      %p116 = scmp.eq.s32.totalorder %s115, 0
      %s118 = sadd.s32 %s117, 1
      %s119 = scalar_select %p116, %s117, %s118
      %p122 = pneg %p116
      %p123 = scmp.eq.s32.totalorder %s43, 3
      %p124 = por %p122, %p123
      %p125 = scmp.ne.s32.totalorder %s117, %s120
      %p126 = scmp.eq.s32.totalorder %s43, 0
      %p127 = por %p125, %p126
      %p128 = scmp.ne.s32.totalorder %s117, %s120
      %p129 = scmp.eq.s32.totalorder %s48, 3
      %p130 = por %p128, %p129
      %p131 = scmp.ne.s32.totalorder %s120, %s121
      %p132 = scmp.eq.s32.totalorder %s48, 0
      %p133 = por %p131, %p132
      %p134 = scmp.ne.s32.totalorder %s120, %s121
      %p135 = scmp.eq.s32.totalorder %s49, 3
      %p136 = por %p134, %p135
      %p138 = scmp.ne.s32.totalorder %s121, %s137
      %p139 = scmp.eq.s32.totalorder %s49, 0
      %p140 = por %p138, %p139
      %s141 = ssub.s32 %s51, %s58
      %p142 = scmp.eq.s32.totalorder %s141, 0
      %s144 = sadd.s32 %s143, 1
      %s145 = scalar_select %p142, %s143, %s144
      %p148 = pneg %p142
      %p149 = scmp.eq.s32.totalorder %s43, 3
      %p150 = por %p148, %p149
      %p151 = scmp.ne.s32.totalorder %s143, %s146
      %p152 = scmp.eq.s32.totalorder %s43, 0
      %p153 = por %p151, %p152
      %p154 = scmp.ne.s32.totalorder %s143, %s146
      %p155 = scmp.eq.s32.totalorder %s48, 3
      %p156 = por %p154, %p155
      %p157 = scmp.ne.s32.totalorder %s146, %s147
      %p158 = scmp.eq.s32.totalorder %s48, 0
      %p159 = por %p157, %p158
      %p160 = scmp.ne.s32.totalorder %s146, %s147
      %p161 = scmp.eq.s32.totalorder %s49, 3
      %p162 = por %p160, %p161
      %p164 = scmp.ne.s32.totalorder %s147, %s163
      %p165 = scmp.eq.s32.totalorder %s49, 0
      %p166 = por %p164, %p165
      %s167 = ssub.s32 %s51, %s58
      %p168 = scmp.eq.s32.totalorder %s167, 0
      %s170 = sadd.s32 %s169, 1
      %s171 = scalar_select %p168, %s169, %s170
      %p174 = pneg %p168
      %p175 = scmp.eq.s32.totalorder %s43, 3
      %p176 = por %p174, %p175
      %p177 = scmp.ne.s32.totalorder %s169, %s172
      %p178 = scmp.eq.s32.totalorder %s43, 0
      %p179 = por %p177, %p178
      %p180 = scmp.ne.s32.totalorder %s169, %s172
      %p181 = scmp.eq.s32.totalorder %s48, 3
      %p182 = por %p180, %p181
      %p183 = scmp.ne.s32.totalorder %s172, %s173
      %p184 = scmp.eq.s32.totalorder %s48, 0
      %p185 = por %p183, %p184
      %p186 = scmp.ne.s32.totalorder %s172, %s173
      %p187 = scmp.eq.s32.totalorder %s49, 3
      %p188 = por %p186, %p187
      %p190 = scmp.ne.s32.totalorder %s173, %s189
      %p191 = scmp.eq.s32.totalorder %s49, 0
      %p192 = por %p190, %p191
      %s193 = ssub.s32 %s51, %s58
      %p194 = scmp.eq.s32.totalorder %s193, 0
      %s196 = sadd.s32 %s195, 1
      %s197 = scalar_select %p194, %s195, %s196
      %p200 = pneg %p194
      %p201 = scmp.eq.s32.totalorder %s43, 3
      %p202 = por %p200, %p201
      %p203 = scmp.ne.s32.totalorder %s195, %s198
      %p204 = scmp.eq.s32.totalorder %s43, 0
      %p205 = por %p203, %p204
      %p206 = scmp.ne.s32.totalorder %s195, %s198
      %p207 = scmp.eq.s32.totalorder %s48, 3
      %p208 = por %p206, %p207
      %p209 = scmp.ne.s32.totalorder %s198, %s199
      %p210 = scmp.eq.s32.totalorder %s48, 0
      %p211 = por %p209, %p210
      %p212 = scmp.ne.s32.totalorder %s198, %s199
      %p213 = scmp.eq.s32.totalorder %s49, 3
      %p214 = por %p212, %p213
      %p216 = scmp.ne.s32.totalorder %s199, %s215
      %p217 = scmp.eq.s32.totalorder %s49, 0
      %p218 = por %p216, %p217
      %s219 = ssub.s32 %s51, %s58
      %p220 = scmp.eq.s32.totalorder %s219, 0
      %s222 = sadd.s32 %s221, 1
      %s223 = scalar_select %p220, %s221, %s222
      %p226 = pneg %p220
      %p227 = scmp.eq.s32.totalorder %s43, 3
      %p228 = por %p226, %p227
      %p229 = scmp.ne.s32.totalorder %s221, %s224
      %p230 = scmp.eq.s32.totalorder %s43, 0
      %p231 = por %p229, %p230
      %p232 = scmp.ne.s32.totalorder %s221, %s224
      %p233 = scmp.eq.s32.totalorder %s48, 3
      %p234 = por %p232, %p233
      %p235 = scmp.ne.s32.totalorder %s224, %s225
      %p236 = scmp.eq.s32.totalorder %s48, 0
      %p237 = por %p235, %p236
      %p238 = scmp.ne.s32.totalorder %s224, %s225
      %p239 = scmp.eq.s32.totalorder %s49, 3
      %p240 = por %p238, %p239
      %p242 = scmp.ne.s32.totalorder %s225, %s241
      %p243 = scmp.eq.s32.totalorder %s49, 0
      %p244 = por %p242, %p243
      %s245 = ssub.s32 %s51, %s58
      %p246 = scmp.eq.s32.totalorder %s245, 0
      %s248 = sadd.s32 %s247, 1
      %s249 = scalar_select %p246, %s247, %s248
      %p252 = pneg %p246
      %p253 = scmp.eq.s32.totalorder %s43, 3
      %p254 = por %p252, %p253
      %p255 = scmp.ne.s32.totalorder %s247, %s250
      %p256 = scmp.eq.s32.totalorder %s43, 0
      %p257 = por %p255, %p256
      %p258 = scmp.ne.s32.totalorder %s247, %s250
      %p259 = scmp.eq.s32.totalorder %s48, 3
      %p260 = por %p258, %p259
      %p261 = scmp.ne.s32.totalorder %s250, %s251
      %p262 = scmp.eq.s32.totalorder %s48, 0
      %p263 = por %p261, %p262
      %p264 = scmp.ne.s32.totalorder %s250, %s251
      %p265 = scmp.eq.s32.totalorder %s49, 3
      %p266 = por %p264, %p265
      %p268 = scmp.ne.s32.totalorder %s251, %s267
      %p269 = scmp.eq.s32.totalorder %s49, 0
      %p270 = por %p268, %p269
      %s271 = ssub.s32 %s51, %s58
      %p272 = scmp.eq.s32.totalorder %s271, 0
      %s274 = sadd.s32 %s273, 1
      %s275 = scalar_select %p272, %s273, %s274
      %p278 = pneg %p272
      %p279 = scmp.eq.s32.totalorder %s43, 3
      %p280 = por %p278, %p279
      %p281 = scmp.ne.s32.totalorder %s273, %s276
      %p282 = scmp.eq.s32.totalorder %s43, 0
      %p283 = por %p281, %p282
      %p284 = scmp.ne.s32.totalorder %s273, %s276
      %p285 = scmp.eq.s32.totalorder %s48, 3
      %p286 = por %p284, %p285
      %p287 = scmp.ne.s32.totalorder %s276, %s277
      %p288 = scmp.eq.s32.totalorder %s48, 0
      %p289 = por %p287, %p288
      %p290 = scmp.ne.s32.totalorder %s276, %s277
      %p291 = scmp.eq.s32.totalorder %s49, 3
      %p292 = por %p290, %p291
      %p294 = scmp.ne.s32.totalorder %s277, %s293
      %p295 = scmp.eq.s32.totalorder %s49, 0
      %p296 = por %p294, %p295
      %s297 = ssub.s32 %s51, %s58
      %p298 = scmp.eq.s32.totalorder %s297, 0
      %s300 = sadd.s32 %s299, 1
      %s301 = scalar_select %p298, %s299, %s300
      %p304 = pneg %p298
      %p305 = scmp.eq.s32.totalorder %s43, 3
      %p306 = por %p304, %p305
      %p307 = scmp.ne.s32.totalorder %s299, %s302
      %p308 = scmp.eq.s32.totalorder %s43, 0
      %p309 = por %p307, %p308
      %p310 = scmp.ne.s32.totalorder %s299, %s302
      %p311 = scmp.eq.s32.totalorder %s48, 3
      %p312 = por %p310, %p311
      %p313 = scmp.ne.s32.totalorder %s302, %s303
      %p314 = scmp.eq.s32.totalorder %s48, 0
      %p315 = por %p313, %p314
      %p316 = scmp.ne.s32.totalorder %s302, %s303
      %p317 = scmp.eq.s32.totalorder %s49, 3
      %p318 = por %p316, %p317
      %p320 = scmp.ne.s32.totalorder %s303, %s319
      %p321 = scmp.eq.s32.totalorder %s49, 0
      %p322 = por %p320, %p321
      %s323 = ssub.s32 %s51, %s58
      %p324 = scmp.eq.s32.totalorder %s323, 0
      %s326 = sadd.s32 %s325, 1
      %s327 = scalar_select %p324, %s325, %s326
      %p330 = pneg %p324
      %p331 = scmp.eq.s32.totalorder %s43, 3
      %p332 = por %p330, %p331
      %p333 = scmp.ne.s32.totalorder %s325, %s328
      %p334 = scmp.eq.s32.totalorder %s43, 0
      %p335 = por %p333, %p334
      %p336 = scmp.ne.s32.totalorder %s325, %s328
      %p337 = scmp.eq.s32.totalorder %s48, 3
      %p338 = por %p336, %p337
      %p339 = scmp.ne.s32.totalorder %s328, %s329
      %p340 = scmp.eq.s32.totalorder %s48, 0
      %p341 = por %p339, %p340
      %p342 = scmp.ne.s32.totalorder %s328, %s329
      %p343 = scmp.eq.s32.totalorder %s49, 3
      %p344 = por %p342, %p343
      %p346 = scmp.ne.s32.totalorder %s329, %s345
      %p347 = scmp.eq.s32.totalorder %s49, 0
      %p348 = por %p346, %p347
      %s349 = ssub.s32 %s51, %s58
      %p350 = scmp.eq.s32.totalorder %s349, 0
      %s352 = sadd.s32 %s351, 1
      %s353 = scalar_select %p350, %s351, %s352
      %p356 = pneg %p350
      %p357 = scmp.eq.s32.totalorder %s43, 3
      %p358 = por %p356, %p357
      %p359 = scmp.ne.s32.totalorder %s351, %s354
      %p360 = scmp.eq.s32.totalorder %s43, 0
      %p361 = por %p359, %p360
      %p362 = scmp.ne.s32.totalorder %s351, %s354
      %p363 = scmp.eq.s32.totalorder %s48, 3
      %p364 = por %p362, %p363
      %p365 = scmp.ne.s32.totalorder %s354, %s355
      %p366 = scmp.eq.s32.totalorder %s48, 0
      %p367 = por %p365, %p366
      %p368 = scmp.ne.s32.totalorder %s354, %s355
      %p369 = scmp.eq.s32.totalorder %s49, 3
      %p370 = por %p368, %p369
      %p372 = scmp.ne.s32.totalorder %s355, %s371
      %p373 = scmp.eq.s32.totalorder %s49, 0
      %p374 = por %p372, %p373
      %s375 = ssub.s32 %s51, %s58
      %p376 = scmp.eq.s32.totalorder %s375, 0
      %s378 = sadd.s32 %s377, 1
      %s379 = scalar_select %p376, %s377, %s378
      %p382 = pneg %p376
      %p383 = scmp.eq.s32.totalorder %s43, 3
      %p384 = por %p382, %p383
      %p385 = scmp.ne.s32.totalorder %s377, %s380
      %p386 = scmp.eq.s32.totalorder %s43, 0
      %p387 = por %p385, %p386
      %p388 = scmp.ne.s32.totalorder %s377, %s380
      %p389 = scmp.eq.s32.totalorder %s48, 3
      %p390 = por %p388, %p389
      %p391 = scmp.ne.s32.totalorder %s380, %s381
      %p392 = scmp.eq.s32.totalorder %s48, 0
      %p393 = por %p391, %p392
      %p394 = scmp.ne.s32.totalorder %s380, %s381
      %p395 = scmp.eq.s32.totalorder %s49, 3
      %p396 = por %p394, %p395
      %p398 = scmp.ne.s32.totalorder %s381, %s397
      %p399 = scmp.eq.s32.totalorder %s49, 0
      %p400 = por %p398, %p399
      %s401 = ssub.s32 %s50, %s62
      %p402 = scmp.eq.s32.totalorder %s401, 0
      %s404 = sadd.s32 %s403, 1
      %s405 = scalar_select %p402, %s403, %s404
      %p408 = pneg %p402
      %p409 = scmp.eq.s32.totalorder %s43, 3
      %p410 = por %p408, %p409
      %p411 = scmp.ne.s32.totalorder %s403, %s406
      %p412 = scmp.eq.s32.totalorder %s43, 0
      %p413 = por %p411, %p412
      %p414 = scmp.ne.s32.totalorder %s403, %s406
      %p415 = scmp.eq.s32.totalorder %s48, 3
      %p416 = por %p414, %p415
      %p417 = scmp.ne.s32.totalorder %s406, %s407
      %p418 = scmp.eq.s32.totalorder %s48, 0
      %p419 = por %p417, %p418
      %p420 = scmp.ne.s32.totalorder %s406, %s407
      %p421 = scmp.eq.s32.totalorder %s49, 3
      %p422 = por %p420, %p421
      %p424 = scmp.ne.s32.totalorder %s407, %s423
      %p425 = scmp.eq.s32.totalorder %s49, 0
      %p426 = por %p424, %p425
      %p427 = scmp.le.s32.totalorder 1, %s43
      %p428 = scmp.lt.s32.totalorder %s43, 5
      %p429 = pnand %p427, %p428
      %p430 = pneg %p429
      // Predicated region
      $region9: #{tpu_custom_call.1} parent=5 // pred_check
        _
      $region10: #{tpu_custom_call.1} parent=5 // pred_check_branch
        %432 = sbr.rel (%p429) target = $region12
      $region11: #{tpu_custom_call.1} parent=5 // pred_region
        %s433 = ssub.s32 %s43, 1
      $region12: #{tpu_custom_call.1} parent=5 // pred_fallthru
        _
      %p434 = scmp.lt.s32.totalorder %s43, 4
      // Predicated region
      $region13: #{tpu_custom_call.1} parent=5 // pred_check
        %p435 = pneg %p434
      $region14: #{tpu_custom_call.1} parent=5 // pred_check_branch
        %437 = sbr.rel (%p435) target = $region16
      $region15: #{tpu_custom_call.1} parent=5 // pred_region
        // Predicated region
        $region17: #{tpu_custom_call.1} parent=15 // pred_check
          %p438 = pneg %p75
        $region18: #{tpu_custom_call.1} parent=15 // pred_check_branch
          %440 = sbr.rel (%p438) target = $region20
        $region19: #{tpu_custom_call.1} parent=15 // pred_region
          %s441 = sand.u32 %s65, 1
          %s442 = scalar_lea.sflag [#allocation4], %s441
          %s443 = sand.u32 %s65, 1
          %s444 = smul.addr %s443, 8
          %s445 = scalar_lea.vmem [#allocation3], %s444
          %s447 = ssub.s32 128, 128
          %448 = vsyncadd %s442, %s447
          %s449 = smul.addr %s50, 128
          %s450 = scalar_lea.hbm %s0, %s449
          %s452 = sshll.u32 %s445, 4
          %s453 = int_to_ptr.vmem [resolvable:$true] %s452
          %455 = dma.hbm_to_vmem [thread:$0]  %s450, 128, %s453, %s442
        $region20: #{tpu_custom_call.1} parent=15 // pred_fallthru
          _
        // Predicated region
        $region21: #{tpu_custom_call.1} parent=15 // pred_check
          %p456 = pneg %p101
        $region22: #{tpu_custom_call.1} parent=15 // pred_check_branch
          %458 = sbr.rel (%p456) target = $region24
        $region23: #{tpu_custom_call.1} parent=15 // pred_region
          %s459 = sand.u32 %s43, 1
          %s460 = scalar_lea.sflag [#allocation7], %s459
          %s461 = sand.u32 %s91, 1
          %s462 = scalar_lea.vmem [#allocation6], %s461
          %s464 = ssub.s32 16, 16
          %465 = vsyncadd %s460, %s464
          %s466 = smul.addr %s51, 16
          %s467 = scalar_lea.hbm %s1, %s466
          %s469 = sshll.u32 %s462, 4
          %s470 = int_to_ptr.vmem [resolvable:$true] %s469
          %472 = dma.hbm_to_vmem [thread:$0]  %s467, 16, %s470, %s460
        $region24: #{tpu_custom_call.1} parent=15 // pred_fallthru
          _
        // Predicated region
        $region25: #{tpu_custom_call.1} parent=15 // pred_check
          %p473 = pneg %p127
        $region26: #{tpu_custom_call.1} parent=15 // pred_check_branch
          %475 = sbr.rel (%p473) target = $region28
        $region27: #{tpu_custom_call.1} parent=15 // pred_region
          %s476 = sand.u32 %s43, 1
          %s477 = scalar_lea.sflag [#allocation7], %s476
          %s478 = sand.u32 %s117, 1
          %s479 = scalar_lea.vmem [#allocation8], %s478
          %s481 = ssub.s32 16, 16
          %482 = vsyncadd %s477, %s481
          %s483 = smul.addr %s51, 16
          %s484 = scalar_lea.hbm %s2, %s483
          %s486 = sshll.u32 %s479, 4
          %s487 = int_to_ptr.vmem [resolvable:$true] %s486
          %489 = dma.hbm_to_vmem [thread:$0]  %s484, 16, %s487, %s477
        $region28: #{tpu_custom_call.1} parent=15 // pred_fallthru
          _
        // Predicated region
        $region29: #{tpu_custom_call.1} parent=15 // pred_check
          %p490 = pneg %p153
        $region30: #{tpu_custom_call.1} parent=15 // pred_check_branch
          %492 = sbr.rel (%p490) target = $region32
        $region31: #{tpu_custom_call.1} parent=15 // pred_region
          %s493 = sand.u32 %s43, 1
          %s494 = scalar_lea.sflag [#allocation10], %s493
          %s495 = sand.u32 %s143, 1
          %s496 = smul.addr %s495, 32
          %s497 = scalar_lea.vmem [#allocation9], %s496
          %s499 = ssub.s32 512, 512
          %500 = vsyncadd %s494, %s499
          %s501 = smul.addr %s51, 4
          %s502 = smul.addr %s501, 128
          %s503 = scalar_lea.hbm %s3, %s502
          %s504 = sshll.u32 %s497, 4
          %s505 = int_to_ptr.vmem [resolvable:$true] %s504
          %510 = dma.hbm_to_vmem [thread:$0]  %s503, 512, %s505, %s494, 128, 128, 8
        $region32: #{tpu_custom_call.1} parent=15 // pred_fallthru
          _
        // Predicated region
        $region33: #{tpu_custom_call.1} parent=15 // pred_check
          %p511 = pneg %p179
        $region34: #{tpu_custom_call.1} parent=15 // pred_check_branch
          %513 = sbr.rel (%p511) target = $region36
        $region35: #{tpu_custom_call.1} parent=15 // pred_region
          %s514 = sand.u32 %s43, 1
          %s515 = scalar_lea.sflag [#allocation10], %s514
          %s516 = sand.u32 %s169, 1
          %s517 = scalar_lea.vmem [#allocation11], %s516
          %s519 = ssub.s32 16, 16
          %520 = vsyncadd %s515, %s519
          %s521 = smul.addr %s51, 16
          %s522 = scalar_lea.hbm %s4, %s521
          %s524 = sshll.u32 %s517, 4
          %s525 = int_to_ptr.vmem [resolvable:$true] %s524
          %527 = dma.hbm_to_vmem [thread:$0]  %s522, 16, %s525, %s515
        $region36: #{tpu_custom_call.1} parent=15 // pred_fallthru
          _
        // Predicated region
        $region37: #{tpu_custom_call.1} parent=15 // pred_check
          %p528 = pneg %p205
        $region38: #{tpu_custom_call.1} parent=15 // pred_check_branch
          %530 = sbr.rel (%p528) target = $region40
        $region39: #{tpu_custom_call.1} parent=15 // pred_region
          %s531 = sand.u32 %s43, 1
          %s532 = scalar_lea.sflag [#allocation13], %s531
          %s533 = sand.u32 %s195, 1
          %s534 = smul.addr %s533, 32
          %s535 = scalar_lea.vmem [#allocation12], %s534
          %s537 = ssub.s32 512, 512
          %538 = vsyncadd %s532, %s537
          %s539 = smul.addr %s51, 4
          %s540 = smul.addr %s539, 128
          %s541 = scalar_lea.hbm %s5, %s540
          %s542 = sshll.u32 %s535, 4
          %s543 = int_to_ptr.vmem [resolvable:$true] %s542
          %548 = dma.hbm_to_vmem [thread:$0]  %s541, 512, %s543, %s532, 128, 128, 8
        $region40: #{tpu_custom_call.1} parent=15 // pred_fallthru
          _
        // Predicated region
        $region41: #{tpu_custom_call.1} parent=15 // pred_check
          %p549 = pneg %p231
        $region42: #{tpu_custom_call.1} parent=15 // pred_check_branch
          %551 = sbr.rel (%p549) target = $region44
        $region43: #{tpu_custom_call.1} parent=15 // pred_region
          %s552 = sand.u32 %s43, 1
          %s553 = scalar_lea.sflag [#allocation13], %s552
          %s554 = sand.u32 %s221, 1
          %s555 = scalar_lea.vmem [#allocation14], %s554
          %s557 = ssub.s32 16, 16
          %558 = vsyncadd %s553, %s557
          %s559 = smul.addr %s51, 16
          %s560 = scalar_lea.hbm %s6, %s559
          %s562 = sshll.u32 %s555, 4
          %s563 = int_to_ptr.vmem [resolvable:$true] %s562
          %565 = dma.hbm_to_vmem [thread:$0]  %s560, 16, %s563, %s553
        $region44: #{tpu_custom_call.1} parent=15 // pred_fallthru
          _
        // Predicated region
        $region45: #{tpu_custom_call.1} parent=15 // pred_check
          %p566 = pneg %p257
        $region46: #{tpu_custom_call.1} parent=15 // pred_check_branch
          %568 = sbr.rel (%p566) target = $region48
        $region47: #{tpu_custom_call.1} parent=15 // pred_region
          %s569 = sand.u32 %s43, 1
          %s570 = scalar_lea.sflag [#allocation16], %s569
          %s571 = sand.u32 %s247, 1
          %s572 = scalar_lea.vmem [#allocation15], %s571
          %s574 = ssub.s32 16, 16
          %575 = vsyncadd %s570, %s574
          %s576 = smul.addr %s51, 16
          %s577 = scalar_lea.hbm %s7, %s576
          %s579 = sshll.u32 %s572, 4
          %s580 = int_to_ptr.vmem [resolvable:$true] %s579
          %582 = dma.hbm_to_vmem [thread:$0]  %s577, 16, %s580, %s570
        $region48: #{tpu_custom_call.1} parent=15 // pred_fallthru
          _
        // Predicated region
        $region49: #{tpu_custom_call.1} parent=15 // pred_check
          %p583 = pneg %p283
        $region50: #{tpu_custom_call.1} parent=15 // pred_check_branch
          %585 = sbr.rel (%p583) target = $region52
        $region51: #{tpu_custom_call.1} parent=15 // pred_region
          %s586 = sand.u32 %s43, 1
          %s587 = scalar_lea.sflag [#allocation16], %s586
          %s588 = sand.u32 %s273, 1
          %s589 = scalar_lea.vmem [#allocation17], %s588
          %s591 = ssub.s32 16, 16
          %592 = vsyncadd %s587, %s591
          %s593 = smul.addr %s51, 16
          %s594 = scalar_lea.hbm %s8, %s593
          %s596 = sshll.u32 %s589, 4
          %s597 = int_to_ptr.vmem [resolvable:$true] %s596
          %599 = dma.hbm_to_vmem [thread:$0]  %s594, 16, %s597, %s587
        $region52: #{tpu_custom_call.1} parent=15 // pred_fallthru
          _
        // Predicated region
        $region53: #{tpu_custom_call.1} parent=15 // pred_check
          %p600 = pneg %p309
        $region54: #{tpu_custom_call.1} parent=15 // pred_check_branch
          %602 = sbr.rel (%p600) target = $region56
        $region55: #{tpu_custom_call.1} parent=15 // pred_region
          %s603 = sand.u32 %s43, 1
          %s604 = scalar_lea.sflag [#allocation19], %s603
          %s605 = sand.u32 %s299, 1
          %s606 = smul.addr %s605, 32
          %s607 = scalar_lea.vmem [#allocation18], %s606
          %s609 = ssub.s32 512, 512
          %610 = vsyncadd %s604, %s609
          %s611 = smul.addr %s51, 4
          %s612 = smul.addr %s611, 128
          %s613 = scalar_lea.hbm %s9, %s612
          %s614 = sshll.u32 %s607, 4
          %s615 = int_to_ptr.vmem [resolvable:$true] %s614
          %620 = dma.hbm_to_vmem [thread:$0]  %s613, 512, %s615, %s604, 128, 128, 8
        $region56: #{tpu_custom_call.1} parent=15 // pred_fallthru
          _
        // Predicated region
        $region57: #{tpu_custom_call.1} parent=15 // pred_check
          %p621 = pneg %p335
        $region58: #{tpu_custom_call.1} parent=15 // pred_check_branch
          %623 = sbr.rel (%p621) target = $region60
        $region59: #{tpu_custom_call.1} parent=15 // pred_region
          %s624 = sand.u32 %s43, 1
          %s625 = scalar_lea.sflag [#allocation19], %s624
          %s626 = sand.u32 %s325, 1
          %s627 = scalar_lea.vmem [#allocation20], %s626
          %s629 = ssub.s32 16, 16
          %630 = vsyncadd %s625, %s629
          %s631 = smul.addr %s51, 16
          %s632 = scalar_lea.hbm %s10, %s631
          %s634 = sshll.u32 %s627, 4
          %s635 = int_to_ptr.vmem [resolvable:$true] %s634
          %637 = dma.hbm_to_vmem [thread:$0]  %s632, 16, %s635, %s625
        $region60: #{tpu_custom_call.1} parent=15 // pred_fallthru
          _
        // Predicated region
        $region61: #{tpu_custom_call.1} parent=15 // pred_check
          %p638 = pneg %p361
        $region62: #{tpu_custom_call.1} parent=15 // pred_check_branch
          %640 = sbr.rel (%p638) target = $region64
        $region63: #{tpu_custom_call.1} parent=15 // pred_region
          %s641 = sand.u32 %s43, 1
          %s642 = scalar_lea.sflag [#allocation22], %s641
          %s643 = sand.u32 %s351, 1
          %s644 = smul.addr %s643, 64
          %s645 = scalar_lea.vmem [#allocation21], %s644
          %s647 = ssub.s32 1024, 1024
          %648 = vsyncadd %s642, %s647
          %s649 = smul.addr %s51, 8
          %s650 = smul.addr %s649, 128
          %s651 = scalar_lea.hbm %s11, %s650
          %s652 = sshll.u32 %s645, 4
          %s653 = int_to_ptr.vmem [resolvable:$true] %s652
          %658 = dma.hbm_to_vmem [thread:$0]  %s651, 1024, %s653, %s642, 128, 128, 8
        $region64: #{tpu_custom_call.1} parent=15 // pred_fallthru
          _
        // Predicated region
        $region65: #{tpu_custom_call.1} parent=15 // pred_check
          %p659 = pneg %p387
        $region66: #{tpu_custom_call.1} parent=15 // pred_check_branch
          %661 = sbr.rel (%p659) target = $region68
        $region67: #{tpu_custom_call.1} parent=15 // pred_region
          %s662 = sand.u32 %s43, 1
          %s663 = scalar_lea.sflag [#allocation22], %s662
          %s664 = sand.u32 %s377, 1
          %s665 = scalar_lea.vmem [#allocation23], %s664
          %s667 = ssub.s32 16, 16
          %668 = vsyncadd %s663, %s667
          %s669 = smul.addr %s51, 16
          %s670 = scalar_lea.hbm %s12, %s669
          %s672 = sshll.u32 %s665, 4
          %s673 = int_to_ptr.vmem [resolvable:$true] %s672
          %675 = dma.hbm_to_vmem [thread:$0]  %s670, 16, %s673, %s663
        $region68: #{tpu_custom_call.1} parent=15 // pred_fallthru
          _
      $region16: #{tpu_custom_call.1} parent=5 // pred_fallthru
        _
      %p676 = scmp.le.s32.totalorder 1, %s43
      %p677 = scmp.lt.s32.totalorder %s43, 5
      %p678 = pnand %p676, %p677
      %p679 = pneg %p678
      // Predicated region
      $region69: #{tpu_custom_call.1} parent=5 // pred_check
        _
      $region70: #{tpu_custom_call.1} parent=5 // pred_check_branch
        %681 = sbr.rel (%p678) target = $region72
      $region71: #{tpu_custom_call.1} parent=5 // pred_region
        %s682 = ssub.s32 %s43, 1
        %s683 = sand.u32 %s68, 1
        %s684 = scalar_lea.sflag [#allocation4], %s683
        %s685 = sand.u32 %s68, 1
        %s686 = smul.addr %s685, 8
        %s687 = scalar_lea.vmem [#allocation3], %s686
        // Predicated region
        $region73: #{tpu_custom_call.1} parent=71 // pred_check
          %p688 = pneg %p81
        $region74: #{tpu_custom_call.1} parent=71 // pred_check_branch
          %690 = sbr.rel (%p688) target = $region76
        $region75: #{tpu_custom_call.1} parent=71 // pred_region
          %691 = dma.done %s684, 128
        $region76: #{tpu_custom_call.1} parent=71 // pred_fallthru
          _
        %s692 = sand.u32 %s48, 1
        %s693 = scalar_lea.sflag [#allocation7], %s692
        %s694 = sand.u32 %s94, 1
        %s695 = scalar_lea.vmem [#allocation6], %s694
        // Predicated region
        $region77: #{tpu_custom_call.1} parent=71 // pred_check
          %p696 = pneg %p107
        $region78: #{tpu_custom_call.1} parent=71 // pred_check_branch
          %698 = sbr.rel (%p696) target = $region80
        $region79: #{tpu_custom_call.1} parent=71 // pred_region
          %699 = dma.done %s693, 16
        $region80: #{tpu_custom_call.1} parent=71 // pred_fallthru
          _
        %s700 = sand.u32 %s48, 1
        %s701 = scalar_lea.sflag [#allocation7], %s700
        %s702 = sand.u32 %s120, 1
        %s703 = scalar_lea.vmem [#allocation8], %s702
        // Predicated region
        $region81: #{tpu_custom_call.1} parent=71 // pred_check
          %p704 = pneg %p133
        $region82: #{tpu_custom_call.1} parent=71 // pred_check_branch
          %706 = sbr.rel (%p704) target = $region84
        $region83: #{tpu_custom_call.1} parent=71 // pred_region
          %707 = dma.done %s701, 16
        $region84: #{tpu_custom_call.1} parent=71 // pred_fallthru
          _
        %s708 = sand.u32 %s48, 1
        %s709 = scalar_lea.sflag [#allocation10], %s708
        %s710 = sand.u32 %s146, 1
        %s711 = smul.addr %s710, 32
        %s712 = scalar_lea.vmem [#allocation9], %s711
        // Predicated region
        $region85: #{tpu_custom_call.1} parent=71 // pred_check
          %p713 = pneg %p159
        $region86: #{tpu_custom_call.1} parent=71 // pred_check_branch
          %715 = sbr.rel (%p713) target = $region88
        $region87: #{tpu_custom_call.1} parent=71 // pred_region
          %716 = dma.done %s709, 512
        $region88: #{tpu_custom_call.1} parent=71 // pred_fallthru
          _
        %s717 = sand.u32 %s48, 1
        %s718 = scalar_lea.sflag [#allocation10], %s717
        %s719 = sand.u32 %s172, 1
        %s720 = scalar_lea.vmem [#allocation11], %s719
        // Predicated region
        $region89: #{tpu_custom_call.1} parent=71 // pred_check
          %p721 = pneg %p185
        $region90: #{tpu_custom_call.1} parent=71 // pred_check_branch
          %723 = sbr.rel (%p721) target = $region92
        $region91: #{tpu_custom_call.1} parent=71 // pred_region
          %724 = dma.done %s718, 16
        $region92: #{tpu_custom_call.1} parent=71 // pred_fallthru
          _
        %s725 = sand.u32 %s48, 1
        %s726 = scalar_lea.sflag [#allocation13], %s725
        %s727 = sand.u32 %s198, 1
        %s728 = smul.addr %s727, 32
        %s729 = scalar_lea.vmem [#allocation12], %s728
        // Predicated region
        $region93: #{tpu_custom_call.1} parent=71 // pred_check
          %p730 = pneg %p211
        $region94: #{tpu_custom_call.1} parent=71 // pred_check_branch
          %732 = sbr.rel (%p730) target = $region96
        $region95: #{tpu_custom_call.1} parent=71 // pred_region
          %733 = dma.done %s726, 512
        $region96: #{tpu_custom_call.1} parent=71 // pred_fallthru
          _
        %s734 = sand.u32 %s48, 1
        %s735 = scalar_lea.sflag [#allocation13], %s734
        %s736 = sand.u32 %s224, 1
        %s737 = scalar_lea.vmem [#allocation14], %s736
        // Predicated region
        $region97: #{tpu_custom_call.1} parent=71 // pred_check
          %p738 = pneg %p237
        $region98: #{tpu_custom_call.1} parent=71 // pred_check_branch
          %740 = sbr.rel (%p738) target = $region100
        $region99: #{tpu_custom_call.1} parent=71 // pred_region
          %741 = dma.done %s735, 16
        $region100: #{tpu_custom_call.1} parent=71 // pred_fallthru
          _
        %s742 = sand.u32 %s48, 1
        %s743 = scalar_lea.sflag [#allocation16], %s742
        %s744 = sand.u32 %s250, 1
        %s745 = scalar_lea.vmem [#allocation15], %s744
        // Predicated region
        $region101: #{tpu_custom_call.1} parent=71 // pred_check
          %p746 = pneg %p263
        $region102: #{tpu_custom_call.1} parent=71 // pred_check_branch
          %748 = sbr.rel (%p746) target = $region104
        $region103: #{tpu_custom_call.1} parent=71 // pred_region
          %749 = dma.done %s743, 16
        $region104: #{tpu_custom_call.1} parent=71 // pred_fallthru
          _
        %s750 = sand.u32 %s48, 1
        %s751 = scalar_lea.sflag [#allocation16], %s750
        %s752 = sand.u32 %s276, 1
        %s753 = scalar_lea.vmem [#allocation17], %s752
        // Predicated region
        $region105: #{tpu_custom_call.1} parent=71 // pred_check
          %p754 = pneg %p289
        $region106: #{tpu_custom_call.1} parent=71 // pred_check_branch
          %756 = sbr.rel (%p754) target = $region108
        $region107: #{tpu_custom_call.1} parent=71 // pred_region
          %757 = dma.done %s751, 16
        $region108: #{tpu_custom_call.1} parent=71 // pred_fallthru
          _
        %s758 = sand.u32 %s48, 1
        %s759 = scalar_lea.sflag [#allocation19], %s758
        %s760 = sand.u32 %s302, 1
        %s761 = smul.addr %s760, 32
        %s762 = scalar_lea.vmem [#allocation18], %s761
        // Predicated region
        $region109: #{tpu_custom_call.1} parent=71 // pred_check
          %p763 = pneg %p315
        $region110: #{tpu_custom_call.1} parent=71 // pred_check_branch
          %765 = sbr.rel (%p763) target = $region112
        $region111: #{tpu_custom_call.1} parent=71 // pred_region
          %766 = dma.done %s759, 512
        $region112: #{tpu_custom_call.1} parent=71 // pred_fallthru
          _
        %s767 = sand.u32 %s48, 1
        %s768 = scalar_lea.sflag [#allocation19], %s767
        %s769 = sand.u32 %s328, 1
        %s770 = scalar_lea.vmem [#allocation20], %s769
        // Predicated region
        $region113: #{tpu_custom_call.1} parent=71 // pred_check
          %p771 = pneg %p341
        $region114: #{tpu_custom_call.1} parent=71 // pred_check_branch
          %773 = sbr.rel (%p771) target = $region116
        $region115: #{tpu_custom_call.1} parent=71 // pred_region
          %774 = dma.done %s768, 16
        $region116: #{tpu_custom_call.1} parent=71 // pred_fallthru
          _
        %s775 = sand.u32 %s48, 1
        %s776 = scalar_lea.sflag [#allocation22], %s775
        %s777 = sand.u32 %s354, 1
        %s778 = smul.addr %s777, 64
        %s779 = scalar_lea.vmem [#allocation21], %s778
        // Predicated region
        $region117: #{tpu_custom_call.1} parent=71 // pred_check
          %p780 = pneg %p367
        $region118: #{tpu_custom_call.1} parent=71 // pred_check_branch
          %782 = sbr.rel (%p780) target = $region120
        $region119: #{tpu_custom_call.1} parent=71 // pred_region
          %783 = dma.done %s776, 1024
        $region120: #{tpu_custom_call.1} parent=71 // pred_fallthru
          _
        %s784 = sand.u32 %s48, 1
        %s785 = scalar_lea.sflag [#allocation22], %s784
        %s786 = sand.u32 %s380, 1
        %s787 = scalar_lea.vmem [#allocation23], %s786
        // Predicated region
        $region121: #{tpu_custom_call.1} parent=71 // pred_check
          %p788 = pneg %p393
        $region122: #{tpu_custom_call.1} parent=71 // pred_check_branch
          %790 = sbr.rel (%p788) target = $region124
        $region123: #{tpu_custom_call.1} parent=71 // pred_region
          %791 = dma.done %s785, 16
        $region124: #{tpu_custom_call.1} parent=71 // pred_fallthru
          _
        %s792 = sand.u32 %s68, 1
        %s793 = scalar_lea.sflag [#allocation4], %s792
        %s794 = sand.u32 %s68, 1
        %s795 = smul.addr %s794, 8
        %s796 = scalar_lea.vmem [#allocation3], %s795
        %p797 = pneg %p81
        %p798 = pneg %p78
        %s799 = sand.u32 %s48, 1
        %s800 = scalar_lea.sflag [#allocation7], %s799
        %s801 = sand.u32 %s94, 1
        %s802 = scalar_lea.vmem [#allocation6], %s801
        %p803 = pneg %p107
        %p804 = pneg %p104
        %s805 = sand.u32 %s48, 1
        %s806 = scalar_lea.sflag [#allocation7], %s805
        %s807 = sand.u32 %s120, 1
        %s808 = scalar_lea.vmem [#allocation8], %s807
        %p809 = pneg %p133
        %p810 = pneg %p130
        %s811 = sand.u32 %s48, 1
        %s812 = scalar_lea.sflag [#allocation10], %s811
        %s813 = sand.u32 %s146, 1
        %s814 = smul.addr %s813, 32
        %s815 = scalar_lea.vmem [#allocation9], %s814
        %p816 = pneg %p159
        %p817 = pneg %p156
        %s818 = sand.u32 %s48, 1
        %s819 = scalar_lea.sflag [#allocation10], %s818
        %s820 = sand.u32 %s172, 1
        %s821 = scalar_lea.vmem [#allocation11], %s820
        %p822 = pneg %p185
        %p823 = pneg %p182
        %s824 = sand.u32 %s48, 1
        %s825 = scalar_lea.sflag [#allocation13], %s824
        %s826 = sand.u32 %s198, 1
        %s827 = smul.addr %s826, 32
        %s828 = scalar_lea.vmem [#allocation12], %s827
        %p829 = pneg %p211
        %p830 = pneg %p208
        %s831 = sand.u32 %s48, 1
        %s832 = scalar_lea.sflag [#allocation13], %s831
        %s833 = sand.u32 %s224, 1
        %s834 = scalar_lea.vmem [#allocation14], %s833
        %p835 = pneg %p237
        %p836 = pneg %p234
        %s837 = sand.u32 %s48, 1
        %s838 = scalar_lea.sflag [#allocation16], %s837
        %s839 = sand.u32 %s250, 1
        %s840 = scalar_lea.vmem [#allocation15], %s839
        %p841 = pneg %p263
        %p842 = pneg %p260
        %s843 = sand.u32 %s48, 1
        %s844 = scalar_lea.sflag [#allocation16], %s843
        %s845 = sand.u32 %s276, 1
        %s846 = scalar_lea.vmem [#allocation17], %s845
        %p847 = pneg %p289
        %p848 = pneg %p286
        %s849 = sand.u32 %s48, 1
        %s850 = scalar_lea.sflag [#allocation19], %s849
        %s851 = sand.u32 %s302, 1
        %s852 = smul.addr %s851, 32
        %s853 = scalar_lea.vmem [#allocation18], %s852
        %p854 = pneg %p315
        %p855 = pneg %p312
        %s856 = sand.u32 %s48, 1
        %s857 = scalar_lea.sflag [#allocation19], %s856
        %s858 = sand.u32 %s328, 1
        %s859 = scalar_lea.vmem [#allocation20], %s858
        %p860 = pneg %p341
        %p861 = pneg %p338
        %s862 = sand.u32 %s48, 1
        %s863 = scalar_lea.sflag [#allocation22], %s862
        %s864 = sand.u32 %s354, 1
        %s865 = smul.addr %s864, 64
        %s866 = scalar_lea.vmem [#allocation21], %s865
        %p867 = pneg %p367
        %p868 = pneg %p364
        %s869 = sand.u32 %s48, 1
        %s870 = scalar_lea.sflag [#allocation22], %s869
        %s871 = sand.u32 %s380, 1
        %s872 = scalar_lea.vmem [#allocation23], %s871
        %p873 = pneg %p393
        %p874 = pneg %p390
        %p875 = pneg %p419
        %p876 = pneg %p416
        %s877 = sand.u32 %s406, 1
        %s878 = scalar_lea.sflag [#allocation5], %s877
        %s879 = sand.u32 %s406, 1
        %s880 = smul.addr %s879, 8
        %s881 = scalar_lea.vmem [#allocation24], %s880
        %p882 = scmp.eq.s32.totalorder %s53, 0
        // Predicated region
        $region125: #{tpu_custom_call.1} parent=71 // pred_check
          %p883 = pneg %p882
        $region126: #{tpu_custom_call.1} parent=71 // pred_check_branch
          %885 = sbr.rel (%p883) target = $region128
        $region127: #{tpu_custom_call.1} parent=71 // pred_region
          %v886 = vld [vmem:[%s687] sm:$0xff]
          %vm887 = vcmask 261120
          %888 = vst.msk [vmem:[#allocation2] sm:$0xff] %vm887, %v886
        $region128: #{tpu_custom_call.1} parent=71 // pred_fallthru
          _
        %v889 = vld [vmem:[#allocation2] sm:$0xff]
        %v890 = vld [vmem:[%s695] sm:$0x1]
        %v891 = vld [vmem:[%s703] sm:$0x1]
        %vm892 = vcmask 261120
        %v893 = vsel %vm892, %v889, 0.0
        %894 = vadd.xlane.f32.xlu0 %v893
        %v895 = vpop.xlane.xlu0 %894
        %v896 = vrcp.pop 32.0
        %v897 = vmul.f32 %v895, %v896
        %v898 = vsub.f32 %v889, %v897
        %v899 = vmul.f32 %v898, %v898
        %v900 = vsel %vm892, %v899, 0.0
        %901 = vadd.xlane.f32.xlu0 %v900
        %v902 = vpop.xlane.xlu0 %901
        %v903 = vmul.f32 %v902, %v896
        %v904 = vadd.f32 %v903, 1e-05
        %v905 = vrsqrt.pop %v904
        %v906 = vmul.f32 %v898, %v905
        %v908 = vlaneseq
        %v909 = vshrl.u32 %v908, 7
        %v910 = vsub.s32 0, %v909
        %v911 = vrot.slane %v890, %v910
        %v913 = vmul.f32 %v906, %v911
        %v915 = vlaneseq
        %v916 = vshrl.u32 %v915, 7
        %v917 = vsub.s32 0, %v916
        %v918 = vrot.slane %v891, %v917
        %v920 = vadd.f32 %v913, %v918
        %v921 = vld [vmem:[%s712] sm:$0xff]
        %v922 = vld [vmem:[%s712 + $0x8] sm:$0xff]
        %v923 = vld [vmem:[%s712 + $0x10] sm:$0xff]
        %v924 = vld [vmem:[%s712 + $0x18] sm:$0xff]
        %v925 = vld [vmem:[%s720] sm:$0x1]
        %v927 = vlaneseq
        %v928 = vshrl.u32 %v927, 7
        %v929 = vsub.s32 0, %v928
        %v930 = vrot.slane %v925, %v929
        %v933 = vsel %vm892, %v920, 0
        %935 = vmatprep.subr.mxu0 0.0
        %936 = vmatpush1.msra.mxu0 %v921
        %937 = vmatprep.subr.mxu0 0.0
        %938 = vmatpush1.msra.mxu0 %v922
        %939 = vmatprep.subr.mxu0 0.0
        %940 = vmatpush1.msra.mxu0 %v923
        %941 = vmatprep.subr.mxu0 0.0
        %942 = vmatpush1.msra.mxu0 %v924
        %943 = vmatprep.subr.mxu0 0.0
        %944 = vmatpush1.msra.mxu0 0.0
        %945 = vmatprep.subr.mxu0 0.0
        %946 = vmatpush1.msra.mxu0 0.0
        %947 = vmatprep.subr.mxu0 0.0
        %948 = vmatpush1.msra.mxu0 0.0
        %949 = vmatprep.subr.mxu0 0.0
        %950 = vmatpush1.msra.mxu0 0.0
        %951 = vmatprep.subr.mxu0 0.0
        %952 = vmatpush1.msra.mxu0 0.0
        %953 = vmatprep.subr.mxu0 0.0
        %954 = vmatpush1.msra.mxu0 0.0
        %955 = vmatprep.subr.mxu0 0.0
        %956 = vmatpush1.msra.mxu0 0.0
        %957 = vmatprep.subr.mxu0 0.0
        %958 = vmatpush1.msra.mxu0 0.0
        %959 = vmatprep.subr.mxu0 0.0
        %960 = vmatpush1.msra.mxu0 0.0
        %961 = vmatprep.subr.mxu0 0.0
        %962 = vmatpush1.msra.mxu0 0.0
        %963 = vmatprep.subr.mxu0 0.0
        %964 = vmatpush1.msra.mxu0 0.0
        %965 = vmatprep.subr.mxu0 0.0
        %966 = vmatpush1.msra.mxu0 0.0
        %967 = vmatprep.subr.mxu0 0.0
        %968 = vmatpush1.msra.mxu0 0.0
        %969 = vmatprep.subr.mxu0 0.0
        %970 = vmatpush1.msra.mxu0 0.0
        %971 = vmatprep.subr.mxu0 0.0
        %972 = vmatpush1.msra.mxu0 0.0
        %973 = vmatprep.subr.mxu0 0.0
        %974 = vmatpush1.msra.mxu0 0.0
        %975 = vmatprep.subr.mxu0 0.0
        %976 = vmatpush1.msra.mxu0 0.0
        %977 = vmatprep.subr.mxu0 0.0
        %978 = vmatpush1.msra.mxu0 0.0
        %979 = vmatprep.subr.mxu0 0.0
        %980 = vmatpush1.msra.mxu0 0.0
        %981 = vmatprep.subr.mxu0 0.0
        %982 = vmatpush1.msra.mxu0 0.0
        %983 = vmatprep.subr.mxu0 0.0
        %984 = vmatpush1.msra.mxu0 0.0
        %985 = vmatprep.subr.mxu0 0.0
        %986 = vmatpush1.msra.mxu0 0.0
        %987 = vmatprep.subr.mxu0 0.0
        %988 = vmatpush1.msra.mxu0 0.0
        %989 = vmatprep.subr.mxu0 0.0
        %990 = vmatpush1.msra.mxu0 0.0
        %991 = vmatprep.subr.mxu0 0.0
        %992 = vmatpush1.msra.mxu0 0.0
        %993 = vmatprep.subr.mxu0 0.0
        %994 = vmatpush1.msra.mxu0 0.0
        %995 = vmatprep.subr.mxu0 0.0
        %996 = vmatpush1.msra.mxu0 0.0
        %997 = vmatprep.subr.mxu0 0.0
        %998 = vmatpush1.msra.mxu0 0.0
        %999 = vmatprep.mubr.f32.mxu0 0.0
        %1000 = vmatmul.mubr.f32.gmra.mrb[0].mxu0 %v933
        %v1001 = vpop.f32.mrb[0].mxu0
        %v1002 = vadd.f32 %v930, %v1001
        %v1003 = vpop.f32.mrb[0].mxu0
        %1004 = vdwg.mxu0
        %1006 = vrot.lane.b32.xlu0 %v1002, 96
        %v1007 = vpop.permute.xlu0 %1006
        %vm1008 = vcmask 64512
        %v1009 = vsel %vm1008, %v1002, 0
        %v1011 = vsel %vm1008, %v1007, 0
        %1013 = vmatprep.subr.mxu0 0.0
        %1014 = vmatpush1.xpose.msra.mxu0 %v1011
        %1015 = vmatprep.subr.mxu0 0.0
        %1016 = vmatpush1.xpose.msra.mxu0 0.0
        %1017 = vmatprep.subr.mxu0 0.0
        %1018 = vmatpush1.xpose.msra.mxu0 0.0
        %1019 = vmatprep.subr.mxu0 0.0
        %1020 = vmatpush1.xpose.msra.mxu0 0.0
        %1021 = vmatprep.subr.mxu0 0.0
        %1022 = vmatpush1.xpose.msra.mxu0 0.0
        %1023 = vmatprep.subr.mxu0 0.0
        %1024 = vmatpush1.xpose.msra.mxu0 0.0
        %1025 = vmatprep.subr.mxu0 0.0
        %1026 = vmatpush1.xpose.msra.mxu0 0.0
        %1027 = vmatprep.subr.mxu0 0.0
        %1028 = vmatpush1.xpose.msra.mxu0 0.0
        %1029 = vmatprep.subr.mxu0 0.0
        %1030 = vmatpush1.xpose.msra.mxu0 0.0
        %1031 = vmatprep.subr.mxu0 0.0
        %1032 = vmatpush1.xpose.msra.mxu0 0.0
        %1033 = vmatprep.subr.mxu0 0.0
        %1034 = vmatpush1.xpose.msra.mxu0 0.0
        %1035 = vmatprep.subr.mxu0 0.0
        %1036 = vmatpush1.xpose.msra.mxu0 0.0
        %1037 = vmatprep.subr.mxu0 0.0
        %1038 = vmatpush1.xpose.msra.mxu0 0.0
        %1039 = vmatprep.subr.mxu0 0.0
        %1040 = vmatpush1.xpose.msra.mxu0 0.0
        %1041 = vmatprep.subr.mxu0 0.0
        %1042 = vmatpush1.xpose.msra.mxu0 0.0
        %1043 = vmatprep.subr.mxu0 0.0
        %1044 = vmatpush1.xpose.msra.mxu0 0.0
        %1045 = vmatprep.subr.mxu0 0.0
        %1046 = vmatpush1.xpose.msra.mxu0 0.0
        %1047 = vmatprep.subr.mxu0 0.0
        %1048 = vmatpush1.xpose.msra.mxu0 0.0
        %1049 = vmatprep.subr.mxu0 0.0
        %1050 = vmatpush1.xpose.msra.mxu0 0.0
        %1051 = vmatprep.subr.mxu0 0.0
        %1052 = vmatpush1.xpose.msra.mxu0 0.0
        %1053 = vmatprep.subr.mxu0 0.0
        %1054 = vmatpush1.xpose.msra.mxu0 0.0
        %1055 = vmatprep.subr.mxu0 0.0
        %1056 = vmatpush1.xpose.msra.mxu0 0.0
        %1057 = vmatprep.subr.mxu0 0.0
        %1058 = vmatpush1.xpose.msra.mxu0 0.0
        %1059 = vmatprep.subr.mxu0 0.0
        %1060 = vmatpush1.xpose.msra.mxu0 0.0
        %1061 = vmatprep.subr.mxu0 0.0
        %1062 = vmatpush1.xpose.msra.mxu0 0.0
        %1063 = vmatprep.subr.mxu0 0.0
        %1064 = vmatpush1.xpose.msra.mxu0 0.0
        %1065 = vmatprep.subr.mxu0 0.0
        %1066 = vmatpush1.xpose.msra.mxu0 0.0
        %1067 = vmatprep.subr.mxu0 0.0
        %1068 = vmatpush1.xpose.msra.mxu0 0.0
        %1069 = vmatprep.subr.mxu0 0.0
        %1070 = vmatpush1.xpose.msra.mxu0 0.0
        %1071 = vmatprep.subr.mxu0 0.0
        %1072 = vmatpush1.xpose.msra.mxu0 0.0
        %1073 = vmatprep.subr.mxu0 0.0
        %1074 = vmatpush1.xpose.msra.mxu0 0.0
        %1075 = vmatprep.subr.mxu0 0.0
        %1076 = vmatpush1.xpose.msra.mxu0 0.0
        %1077 = vmatprep.mubr.f32.mxu0 0.0
        %1078 = vmatmul.mubr.f32.gmra.mrb[0].mxu0 %v1009
        %v1079 = vpop.f32.mrb[0].mxu0
        %v1080 = vadd.f32 0.0, %v1079
        %v1081 = vpop.f32.mrb[0].mxu0
        %1082 = vdwg.mxu0
        %v1083 = vsel %vm1008, %v1080, -inf
        %1084 = vmax.xlane.f32.xlu0 %v1083
        %v1085 = vpop.xlane.xlu0 %1084
        %v1086 = vsub.f32 %v1080, %v1085
        %v1087 = vmul.f32 %v1086, 1.442695
        %v1088 = vpow.pop %v1087
        %v1089 = vsel %vm1008, %v1088, 0.0
        %1090 = vadd.xlane.f32.xlu0 %v1089
        %v1091 = vpop.xlane.xlu0 %1090
        %v1092 = vrcp.pop %v1091
        %v1093 = vmul.f32 %v1088, %v1092
        %1094 = vrot.lane.b32.xlu0 %v1002, 64
        %v1095 = vpop.permute.xlu0 %1094
        %v1098 = vsel %vm1008, %v1093, 0
        %1100 = vmatprep.subr.mxu0 0.0
        %1101 = vmatpush1.msra.mxu0 %v1095
        %1102 = vmatprep.subr.mxu0 0.0
        %1103 = vmatpush1.msra.mxu0 0.0
        %1104 = vmatprep.subr.mxu0 0.0
        %1105 = vmatpush1.msra.mxu0 0.0
        %1106 = vmatprep.subr.mxu0 0.0
        %1107 = vmatpush1.msra.mxu0 0.0
        %1108 = vmatprep.subr.mxu0 0.0
        %1109 = vmatpush1.msra.mxu0 0.0
        %1110 = vmatprep.subr.mxu0 0.0
        %1111 = vmatpush1.msra.mxu0 0.0
        %1112 = vmatprep.subr.mxu0 0.0
        %1113 = vmatpush1.msra.mxu0 0.0
        %1114 = vmatprep.subr.mxu0 0.0
        %1115 = vmatpush1.msra.mxu0 0.0
        %1116 = vmatprep.subr.mxu0 0.0
        %1117 = vmatpush1.msra.mxu0 0.0
        %1118 = vmatprep.subr.mxu0 0.0
        %1119 = vmatpush1.msra.mxu0 0.0
        %1120 = vmatprep.subr.mxu0 0.0
        %1121 = vmatpush1.msra.mxu0 0.0
        %1122 = vmatprep.subr.mxu0 0.0
        %1123 = vmatpush1.msra.mxu0 0.0
        %1124 = vmatprep.subr.mxu0 0.0
        %1125 = vmatpush1.msra.mxu0 0.0
        %1126 = vmatprep.subr.mxu0 0.0
        %1127 = vmatpush1.msra.mxu0 0.0
        %1128 = vmatprep.subr.mxu0 0.0
        %1129 = vmatpush1.msra.mxu0 0.0
        %1130 = vmatprep.subr.mxu0 0.0
        %1131 = vmatpush1.msra.mxu0 0.0
        %1132 = vmatprep.subr.mxu0 0.0
        %1133 = vmatpush1.msra.mxu0 0.0
        %1134 = vmatprep.subr.mxu0 0.0
        %1135 = vmatpush1.msra.mxu0 0.0
        %1136 = vmatprep.subr.mxu0 0.0
        %1137 = vmatpush1.msra.mxu0 0.0
        %1138 = vmatprep.subr.mxu0 0.0
        %1139 = vmatpush1.msra.mxu0 0.0
        %1140 = vmatprep.subr.mxu0 0.0
        %1141 = vmatpush1.msra.mxu0 0.0
        %1142 = vmatprep.subr.mxu0 0.0
        %1143 = vmatpush1.msra.mxu0 0.0
        %1144 = vmatprep.subr.mxu0 0.0
        %1145 = vmatpush1.msra.mxu0 0.0
        %1146 = vmatprep.subr.mxu0 0.0
        %1147 = vmatpush1.msra.mxu0 0.0
        %1148 = vmatprep.subr.mxu0 0.0
        %1149 = vmatpush1.msra.mxu0 0.0
        %1150 = vmatprep.subr.mxu0 0.0
        %1151 = vmatpush1.msra.mxu0 0.0
        %1152 = vmatprep.subr.mxu0 0.0
        %1153 = vmatpush1.msra.mxu0 0.0
        %1154 = vmatprep.subr.mxu0 0.0
        %1155 = vmatpush1.msra.mxu0 0.0
        %1156 = vmatprep.subr.mxu0 0.0
        %1157 = vmatpush1.msra.mxu0 0.0
        %1158 = vmatprep.subr.mxu0 0.0
        %1159 = vmatpush1.msra.mxu0 0.0
        %1160 = vmatprep.subr.mxu0 0.0
        %1161 = vmatpush1.msra.mxu0 0.0
        %1162 = vmatprep.subr.mxu0 0.0
        %1163 = vmatpush1.msra.mxu0 0.0
        %1164 = vmatprep.mubr.f32.mxu0 0.0
        %1165 = vmatmul.mubr.f32.gmra.mrb[0].mxu0 %v1098
        %v1166 = vpop.f32.mrb[0].mxu0
        %v1167 = vadd.f32 0.0, %v1166
        %v1168 = vpop.f32.mrb[0].mxu0
        %1169 = vdwg.mxu0
        %1170 = vrot.lane.b32.xlu0 %v1002, 120
        %v1171 = vpop.permute.xlu0 %1170
        %1172 = vrot.lane.b32.xlu0 %v1002, 88
        %v1173 = vpop.permute.xlu0 %1172
        %v1174 = vsel %vm1008, %v1171, 0
        %v1176 = vsel %vm1008, %v1173, 0
        %1178 = vmatprep.subr.mxu0 0.0
        %1179 = vmatpush1.xpose.msra.mxu0 %v1176
        %1180 = vmatprep.subr.mxu0 0.0
        %1181 = vmatpush1.xpose.msra.mxu0 0.0
        %1182 = vmatprep.subr.mxu0 0.0
        %1183 = vmatpush1.xpose.msra.mxu0 0.0
        %1184 = vmatprep.subr.mxu0 0.0
        %1185 = vmatpush1.xpose.msra.mxu0 0.0
        %1186 = vmatprep.subr.mxu0 0.0
        %1187 = vmatpush1.xpose.msra.mxu0 0.0
        %1188 = vmatprep.subr.mxu0 0.0
        %1189 = vmatpush1.xpose.msra.mxu0 0.0
        %1190 = vmatprep.subr.mxu0 0.0
        %1191 = vmatpush1.xpose.msra.mxu0 0.0
        %1192 = vmatprep.subr.mxu0 0.0
        %1193 = vmatpush1.xpose.msra.mxu0 0.0
        %1194 = vmatprep.subr.mxu0 0.0
        %1195 = vmatpush1.xpose.msra.mxu0 0.0
        %1196 = vmatprep.subr.mxu0 0.0
        %1197 = vmatpush1.xpose.msra.mxu0 0.0
        %1198 = vmatprep.subr.mxu0 0.0
        %1199 = vmatpush1.xpose.msra.mxu0 0.0
        %1200 = vmatprep.subr.mxu0 0.0
        %1201 = vmatpush1.xpose.msra.mxu0 0.0
        %1202 = vmatprep.subr.mxu0 0.0
        %1203 = vmatpush1.xpose.msra.mxu0 0.0
        %1204 = vmatprep.subr.mxu0 0.0
        %1205 = vmatpush1.xpose.msra.mxu0 0.0
        %1206 = vmatprep.subr.mxu0 0.0
        %1207 = vmatpush1.xpose.msra.mxu0 0.0
        %1208 = vmatprep.subr.mxu0 0.0
        %1209 = vmatpush1.xpose.msra.mxu0 0.0
        %1210 = vmatprep.subr.mxu0 0.0
        %1211 = vmatpush1.xpose.msra.mxu0 0.0
        %1212 = vmatprep.subr.mxu0 0.0
        %1213 = vmatpush1.xpose.msra.mxu0 0.0
        %1214 = vmatprep.subr.mxu0 0.0
        %1215 = vmatpush1.xpose.msra.mxu0 0.0
        %1216 = vmatprep.subr.mxu0 0.0
        %1217 = vmatpush1.xpose.msra.mxu0 0.0
        %1218 = vmatprep.subr.mxu0 0.0
        %1219 = vmatpush1.xpose.msra.mxu0 0.0
        %1220 = vmatprep.subr.mxu0 0.0
        %1221 = vmatpush1.xpose.msra.mxu0 0.0
        %1222 = vmatprep.subr.mxu0 0.0
        %1223 = vmatpush1.xpose.msra.mxu0 0.0
        %1224 = vmatprep.subr.mxu0 0.0
        %1225 = vmatpush1.xpose.msra.mxu0 0.0
        %1226 = vmatprep.subr.mxu0 0.0
        %1227 = vmatpush1.xpose.msra.mxu0 0.0
        %1228 = vmatprep.subr.mxu0 0.0
        %1229 = vmatpush1.xpose.msra.mxu0 0.0
        %1230 = vmatprep.subr.mxu0 0.0
        %1231 = vmatpush1.xpose.msra.mxu0 0.0
        %1232 = vmatprep.subr.mxu0 0.0
        %1233 = vmatpush1.xpose.msra.mxu0 0.0
        %1234 = vmatprep.subr.mxu0 0.0
        %1235 = vmatpush1.xpose.msra.mxu0 0.0
        %1236 = vmatprep.subr.mxu0 0.0
        %1237 = vmatpush1.xpose.msra.mxu0 0.0
        %1238 = vmatprep.subr.mxu0 0.0
        %1239 = vmatpush1.xpose.msra.mxu0 0.0
        %1240 = vmatprep.subr.mxu0 0.0
        %1241 = vmatpush1.xpose.msra.mxu0 0.0
        %1242 = vmatprep.mubr.f32.mxu0 0.0
        %1243 = vmatmul.mubr.f32.gmra.mrb[0].mxu0 %v1174
        %v1244 = vpop.f32.mrb[0].mxu0
        %v1245 = vadd.f32 0.0, %v1244
        %v1246 = vpop.f32.mrb[0].mxu0
        %1247 = vdwg.mxu0
        %v1248 = vsel %vm1008, %v1245, -inf
        %1249 = vmax.xlane.f32.xlu0 %v1248
        %v1250 = vpop.xlane.xlu0 %1249
        %v1251 = vsub.f32 %v1245, %v1250
        %v1252 = vmul.f32 %v1251, 1.442695
        %v1253 = vpow.pop %v1252
        %v1254 = vsel %vm1008, %v1253, 0.0
        %1255 = vadd.xlane.f32.xlu0 %v1254
        %v1256 = vpop.xlane.xlu0 %1255
        %v1257 = vrcp.pop %v1256
        %v1258 = vmul.f32 %v1253, %v1257
        %1259 = vrot.lane.b32.xlu0 %v1002, 56
        %v1260 = vpop.permute.xlu0 %1259
        %v1263 = vsel %vm1008, %v1258, 0
        %1265 = vmatprep.subr.mxu0 0.0
        %1266 = vmatpush1.msra.mxu0 %v1260
        %1267 = vmatprep.subr.mxu0 0.0
        %1268 = vmatpush1.msra.mxu0 0.0
        %1269 = vmatprep.subr.mxu0 0.0
        %1270 = vmatpush1.msra.mxu0 0.0
        %1271 = vmatprep.subr.mxu0 0.0
        %1272 = vmatpush1.msra.mxu0 0.0
        %1273 = vmatprep.subr.mxu0 0.0
        %1274 = vmatpush1.msra.mxu0 0.0
        %1275 = vmatprep.subr.mxu0 0.0
        %1276 = vmatpush1.msra.mxu0 0.0
        %1277 = vmatprep.subr.mxu0 0.0
        %1278 = vmatpush1.msra.mxu0 0.0
        %1279 = vmatprep.subr.mxu0 0.0
        %1280 = vmatpush1.msra.mxu0 0.0
        %1281 = vmatprep.subr.mxu0 0.0
        %1282 = vmatpush1.msra.mxu0 0.0
        %1283 = vmatprep.subr.mxu0 0.0
        %1284 = vmatpush1.msra.mxu0 0.0
        %1285 = vmatprep.subr.mxu0 0.0
        %1286 = vmatpush1.msra.mxu0 0.0
        %1287 = vmatprep.subr.mxu0 0.0
        %1288 = vmatpush1.msra.mxu0 0.0
        %1289 = vmatprep.subr.mxu0 0.0
        %1290 = vmatpush1.msra.mxu0 0.0
        %1291 = vmatprep.subr.mxu0 0.0
        %1292 = vmatpush1.msra.mxu0 0.0
        %1293 = vmatprep.subr.mxu0 0.0
        %1294 = vmatpush1.msra.mxu0 0.0
        %1295 = vmatprep.subr.mxu0 0.0
        %1296 = vmatpush1.msra.mxu0 0.0
        %1297 = vmatprep.subr.mxu0 0.0
        %1298 = vmatpush1.msra.mxu0 0.0
        %1299 = vmatprep.subr.mxu0 0.0
        %1300 = vmatpush1.msra.mxu0 0.0
        %1301 = vmatprep.subr.mxu0 0.0
        %1302 = vmatpush1.msra.mxu0 0.0
        %1303 = vmatprep.subr.mxu0 0.0
        %1304 = vmatpush1.msra.mxu0 0.0
        %1305 = vmatprep.subr.mxu0 0.0
        %1306 = vmatpush1.msra.mxu0 0.0
        %1307 = vmatprep.subr.mxu0 0.0
        %1308 = vmatpush1.msra.mxu0 0.0
        %1309 = vmatprep.subr.mxu0 0.0
        %1310 = vmatpush1.msra.mxu0 0.0
        %1311 = vmatprep.subr.mxu0 0.0
        %1312 = vmatpush1.msra.mxu0 0.0
        %1313 = vmatprep.subr.mxu0 0.0
        %1314 = vmatpush1.msra.mxu0 0.0
        %1315 = vmatprep.subr.mxu0 0.0
        %1316 = vmatpush1.msra.mxu0 0.0
        %1317 = vmatprep.subr.mxu0 0.0
        %1318 = vmatpush1.msra.mxu0 0.0
        %1319 = vmatprep.subr.mxu0 0.0
        %1320 = vmatpush1.msra.mxu0 0.0
        %1321 = vmatprep.subr.mxu0 0.0
        %1322 = vmatpush1.msra.mxu0 0.0
        %1323 = vmatprep.subr.mxu0 0.0
        %1324 = vmatpush1.msra.mxu0 0.0
        %1325 = vmatprep.subr.mxu0 0.0
        %1326 = vmatpush1.msra.mxu0 0.0
        %1327 = vmatprep.subr.mxu0 0.0
        %1328 = vmatpush1.msra.mxu0 0.0
        %1329 = vmatprep.mubr.f32.mxu0 0.0
        %1330 = vmatmul.mubr.f32.gmra.mrb[0].mxu0 %v1263
        %v1331 = vpop.f32.mrb[0].mxu0
        %v1332 = vadd.f32 0.0, %v1331
        %v1333 = vpop.f32.mrb[0].mxu0
        %1334 = vdwg.mxu0
        %1335 = vrot.lane.b32.xlu0 %v1002, 112
        %v1336 = vpop.permute.xlu0 %1335
        %1337 = vrot.lane.b32.xlu0 %v1002, 80
        %v1338 = vpop.permute.xlu0 %1337
        %v1339 = vsel %vm1008, %v1336, 0
        %v1341 = vsel %vm1008, %v1338, 0
        %1343 = vmatprep.subr.mxu0 0.0
        %1344 = vmatpush1.xpose.msra.mxu0 %v1341
        %1345 = vmatprep.subr.mxu0 0.0
        %1346 = vmatpush1.xpose.msra.mxu0 0.0
        %1347 = vmatprep.subr.mxu0 0.0
        %1348 = vmatpush1.xpose.msra.mxu0 0.0
        %1349 = vmatprep.subr.mxu0 0.0
        %1350 = vmatpush1.xpose.msra.mxu0 0.0
        %1351 = vmatprep.subr.mxu0 0.0
        %1352 = vmatpush1.xpose.msra.mxu0 0.0
        %1353 = vmatprep.subr.mxu0 0.0
        %1354 = vmatpush1.xpose.msra.mxu0 0.0
        %1355 = vmatprep.subr.mxu0 0.0
        %1356 = vmatpush1.xpose.msra.mxu0 0.0
        %1357 = vmatprep.subr.mxu0 0.0
        %1358 = vmatpush1.xpose.msra.mxu0 0.0
        %1359 = vmatprep.subr.mxu0 0.0
        %1360 = vmatpush1.xpose.msra.mxu0 0.0
        %1361 = vmatprep.subr.mxu0 0.0
        %1362 = vmatpush1.xpose.msra.mxu0 0.0
        %1363 = vmatprep.subr.mxu0 0.0
        %1364 = vmatpush1.xpose.msra.mxu0 0.0
        %1365 = vmatprep.subr.mxu0 0.0
        %1366 = vmatpush1.xpose.msra.mxu0 0.0
        %1367 = vmatprep.subr.mxu0 0.0
        %1368 = vmatpush1.xpose.msra.mxu0 0.0
        %1369 = vmatprep.subr.mxu0 0.0
        %1370 = vmatpush1.xpose.msra.mxu0 0.0
        %1371 = vmatprep.subr.mxu0 0.0
        %1372 = vmatpush1.xpose.msra.mxu0 0.0
        %1373 = vmatprep.subr.mxu0 0.0
        %1374 = vmatpush1.xpose.msra.mxu0 0.0
        %1375 = vmatprep.subr.mxu0 0.0
        %1376 = vmatpush1.xpose.msra.mxu0 0.0
        %1377 = vmatprep.subr.mxu0 0.0
        %1378 = vmatpush1.xpose.msra.mxu0 0.0
        %1379 = vmatprep.subr.mxu0 0.0
        %1380 = vmatpush1.xpose.msra.mxu0 0.0
        %1381 = vmatprep.subr.mxu0 0.0
        %1382 = vmatpush1.xpose.msra.mxu0 0.0
        %1383 = vmatprep.subr.mxu0 0.0
        %1384 = vmatpush1.xpose.msra.mxu0 0.0
        %1385 = vmatprep.subr.mxu0 0.0
        %1386 = vmatpush1.xpose.msra.mxu0 0.0
        %1387 = vmatprep.subr.mxu0 0.0
        %1388 = vmatpush1.xpose.msra.mxu0 0.0
        %1389 = vmatprep.subr.mxu0 0.0
        %1390 = vmatpush1.xpose.msra.mxu0 0.0
        %1391 = vmatprep.subr.mxu0 0.0
        %1392 = vmatpush1.xpose.msra.mxu0 0.0
        %1393 = vmatprep.subr.mxu0 0.0
        %1394 = vmatpush1.xpose.msra.mxu0 0.0
        %1395 = vmatprep.subr.mxu0 0.0
        %1396 = vmatpush1.xpose.msra.mxu0 0.0
        %1397 = vmatprep.subr.mxu0 0.0
        %1398 = vmatpush1.xpose.msra.mxu0 0.0
        %1399 = vmatprep.subr.mxu0 0.0
        %1400 = vmatpush1.xpose.msra.mxu0 0.0
        %1401 = vmatprep.subr.mxu0 0.0
        %1402 = vmatpush1.xpose.msra.mxu0 0.0
        %1403 = vmatprep.subr.mxu0 0.0
        %1404 = vmatpush1.xpose.msra.mxu0 0.0
        %1405 = vmatprep.subr.mxu0 0.0
        %1406 = vmatpush1.xpose.msra.mxu0 0.0
        %1407 = vmatprep.mubr.f32.mxu0 0.0
        %1408 = vmatmul.mubr.f32.gmra.mrb[0].mxu0 %v1339
        %v1409 = vpop.f32.mrb[0].mxu0
        %v1410 = vadd.f32 0.0, %v1409
        %v1411 = vpop.f32.mrb[0].mxu0
        %1412 = vdwg.mxu0
        %v1413 = vsel %vm1008, %v1410, -inf
        %1414 = vmax.xlane.f32.xlu0 %v1413
        %v1415 = vpop.xlane.xlu0 %1414
        %v1416 = vsub.f32 %v1410, %v1415
        %v1417 = vmul.f32 %v1416, 1.442695
        %v1418 = vpow.pop %v1417
        %v1419 = vsel %vm1008, %v1418, 0.0
        %1420 = vadd.xlane.f32.xlu0 %v1419
        %v1421 = vpop.xlane.xlu0 %1420
        %v1422 = vrcp.pop %v1421
        %v1423 = vmul.f32 %v1418, %v1422
        %1424 = vrot.lane.b32.xlu0 %v1002, 48
        %v1425 = vpop.permute.xlu0 %1424
        %v1428 = vsel %vm1008, %v1423, 0
        %1430 = vmatprep.subr.mxu0 0.0
        %1431 = vmatpush1.msra.mxu0 %v1425
        %1432 = vmatprep.subr.mxu0 0.0
        %1433 = vmatpush1.msra.mxu0 0.0
        %1434 = vmatprep.subr.mxu0 0.0
        %1435 = vmatpush1.msra.mxu0 0.0
        %1436 = vmatprep.subr.mxu0 0.0
        %1437 = vmatpush1.msra.mxu0 0.0
        %1438 = vmatprep.subr.mxu0 0.0
        %1439 = vmatpush1.msra.mxu0 0.0
        %1440 = vmatprep.subr.mxu0 0.0
        %1441 = vmatpush1.msra.mxu0 0.0
        %1442 = vmatprep.subr.mxu0 0.0
        %1443 = vmatpush1.msra.mxu0 0.0
        %1444 = vmatprep.subr.mxu0 0.0
        %1445 = vmatpush1.msra.mxu0 0.0
        %1446 = vmatprep.subr.mxu0 0.0
        %1447 = vmatpush1.msra.mxu0 0.0
        %1448 = vmatprep.subr.mxu0 0.0
        %1449 = vmatpush1.msra.mxu0 0.0
        %1450 = vmatprep.subr.mxu0 0.0
        %1451 = vmatpush1.msra.mxu0 0.0
        %1452 = vmatprep.subr.mxu0 0.0
        %1453 = vmatpush1.msra.mxu0 0.0
        %1454 = vmatprep.subr.mxu0 0.0
        %1455 = vmatpush1.msra.mxu0 0.0
        %1456 = vmatprep.subr.mxu0 0.0
        %1457 = vmatpush1.msra.mxu0 0.0
        %1458 = vmatprep.subr.mxu0 0.0
        %1459 = vmatpush1.msra.mxu0 0.0
        %1460 = vmatprep.subr.mxu0 0.0
        %1461 = vmatpush1.msra.mxu0 0.0
        %1462 = vmatprep.subr.mxu0 0.0
        %1463 = vmatpush1.msra.mxu0 0.0
        %1464 = vmatprep.subr.mxu0 0.0
        %1465 = vmatpush1.msra.mxu0 0.0
        %1466 = vmatprep.subr.mxu0 0.0
        %1467 = vmatpush1.msra.mxu0 0.0
        %1468 = vmatprep.subr.mxu0 0.0
        %1469 = vmatpush1.msra.mxu0 0.0
        %1470 = vmatprep.subr.mxu0 0.0
        %1471 = vmatpush1.msra.mxu0 0.0
        %1472 = vmatprep.subr.mxu0 0.0
        %1473 = vmatpush1.msra.mxu0 0.0
        %1474 = vmatprep.subr.mxu0 0.0
        %1475 = vmatpush1.msra.mxu0 0.0
        %1476 = vmatprep.subr.mxu0 0.0
        %1477 = vmatpush1.msra.mxu0 0.0
        %1478 = vmatprep.subr.mxu0 0.0
        %1479 = vmatpush1.msra.mxu0 0.0
        %1480 = vmatprep.subr.mxu0 0.0
        %1481 = vmatpush1.msra.mxu0 0.0
        %1482 = vmatprep.subr.mxu0 0.0
        %1483 = vmatpush1.msra.mxu0 0.0
        %1484 = vmatprep.subr.mxu0 0.0
        %1485 = vmatpush1.msra.mxu0 0.0
        %1486 = vmatprep.subr.mxu0 0.0
        %1487 = vmatpush1.msra.mxu0 0.0
        %1488 = vmatprep.subr.mxu0 0.0
        %1489 = vmatpush1.msra.mxu0 0.0
        %1490 = vmatprep.subr.mxu0 0.0
        %1491 = vmatpush1.msra.mxu0 0.0
        %1492 = vmatprep.subr.mxu0 0.0
        %1493 = vmatpush1.msra.mxu0 0.0
        %1494 = vmatprep.mubr.f32.mxu0 0.0
        %1495 = vmatmul.mubr.f32.gmra.mrb[0].mxu0 %v1428
        %v1496 = vpop.f32.mrb[0].mxu0
        %v1497 = vadd.f32 0.0, %v1496
        %v1498 = vpop.f32.mrb[0].mxu0
        %1499 = vdwg.mxu0
        %1500 = vrot.lane.b32.xlu0 %v1002, 104
        %v1501 = vpop.permute.xlu0 %1500
        %1502 = vrot.lane.b32.xlu0 %v1002, 72
        %v1503 = vpop.permute.xlu0 %1502
        %v1504 = vsel %vm1008, %v1501, 0
        %v1506 = vsel %vm1008, %v1503, 0
        %1508 = vmatprep.subr.mxu0 0.0
        %1509 = vmatpush1.xpose.msra.mxu0 %v1506
        %1510 = vmatprep.subr.mxu0 0.0
        %1511 = vmatpush1.xpose.msra.mxu0 0.0
        %1512 = vmatprep.subr.mxu0 0.0
        %1513 = vmatpush1.xpose.msra.mxu0 0.0
        %1514 = vmatprep.subr.mxu0 0.0
        %1515 = vmatpush1.xpose.msra.mxu0 0.0
        %1516 = vmatprep.subr.mxu0 0.0
        %1517 = vmatpush1.xpose.msra.mxu0 0.0
        %1518 = vmatprep.subr.mxu0 0.0
        %1519 = vmatpush1.xpose.msra.mxu0 0.0
        %1520 = vmatprep.subr.mxu0 0.0
        %1521 = vmatpush1.xpose.msra.mxu0 0.0
        %1522 = vmatprep.subr.mxu0 0.0
        %1523 = vmatpush1.xpose.msra.mxu0 0.0
        %1524 = vmatprep.subr.mxu0 0.0
        %1525 = vmatpush1.xpose.msra.mxu0 0.0
        %1526 = vmatprep.subr.mxu0 0.0
        %1527 = vmatpush1.xpose.msra.mxu0 0.0
        %1528 = vmatprep.subr.mxu0 0.0
        %1529 = vmatpush1.xpose.msra.mxu0 0.0
        %1530 = vmatprep.subr.mxu0 0.0
        %1531 = vmatpush1.xpose.msra.mxu0 0.0
        %1532 = vmatprep.subr.mxu0 0.0
        %1533 = vmatpush1.xpose.msra.mxu0 0.0
        %1534 = vmatprep.subr.mxu0 0.0
        %1535 = vmatpush1.xpose.msra.mxu0 0.0
        %1536 = vmatprep.subr.mxu0 0.0
        %1537 = vmatpush1.xpose.msra.mxu0 0.0
        %1538 = vmatprep.subr.mxu0 0.0
        %1539 = vmatpush1.xpose.msra.mxu0 0.0
        %1540 = vmatprep.subr.mxu0 0.0
        %1541 = vmatpush1.xpose.msra.mxu0 0.0
        %1542 = vmatprep.subr.mxu0 0.0
        %1543 = vmatpush1.xpose.msra.mxu0 0.0
        %1544 = vmatprep.subr.mxu0 0.0
        %1545 = vmatpush1.xpose.msra.mxu0 0.0
        %1546 = vmatprep.subr.mxu0 0.0
        %1547 = vmatpush1.xpose.msra.mxu0 0.0
        %1548 = vmatprep.subr.mxu0 0.0
        %1549 = vmatpush1.xpose.msra.mxu0 0.0
        %1550 = vmatprep.subr.mxu0 0.0
        %1551 = vmatpush1.xpose.msra.mxu0 0.0
        %1552 = vmatprep.subr.mxu0 0.0
        %1553 = vmatpush1.xpose.msra.mxu0 0.0
        %1554 = vmatprep.subr.mxu0 0.0
        %1555 = vmatpush1.xpose.msra.mxu0 0.0
        %1556 = vmatprep.subr.mxu0 0.0
        %1557 = vmatpush1.xpose.msra.mxu0 0.0
        %1558 = vmatprep.subr.mxu0 0.0
        %1559 = vmatpush1.xpose.msra.mxu0 0.0
        %1560 = vmatprep.subr.mxu0 0.0
        %1561 = vmatpush1.xpose.msra.mxu0 0.0
        %1562 = vmatprep.subr.mxu0 0.0
        %1563 = vmatpush1.xpose.msra.mxu0 0.0
        %1564 = vmatprep.subr.mxu0 0.0
        %1565 = vmatpush1.xpose.msra.mxu0 0.0
        %1566 = vmatprep.subr.mxu0 0.0
        %1567 = vmatpush1.xpose.msra.mxu0 0.0
        %1568 = vmatprep.subr.mxu0 0.0
        %1569 = vmatpush1.xpose.msra.mxu0 0.0
        %1570 = vmatprep.subr.mxu0 0.0
        %1571 = vmatpush1.xpose.msra.mxu0 0.0
        %1572 = vmatprep.mubr.f32.mxu0 0.0
        %1573 = vmatmul.mubr.f32.gmra.mrb[0].mxu0 %v1504
        %v1574 = vpop.f32.mrb[0].mxu0
        %v1575 = vadd.f32 0.0, %v1574
        %v1576 = vpop.f32.mrb[0].mxu0
        %1577 = vdwg.mxu0
        %v1578 = vsel %vm1008, %v1575, -inf
        %1579 = vmax.xlane.f32.xlu0 %v1578
        %v1580 = vpop.xlane.xlu0 %1579
        %v1581 = vsub.f32 %v1575, %v1580
        %v1582 = vmul.f32 %v1581, 1.442695
        %v1583 = vpow.pop %v1582
        %v1584 = vsel %vm1008, %v1583, 0.0
        %1585 = vadd.xlane.f32.xlu0 %v1584
        %v1586 = vpop.xlane.xlu0 %1585
        %v1587 = vrcp.pop %v1586
        %v1588 = vmul.f32 %v1583, %v1587
        %1589 = vrot.lane.b32.xlu0 %v1002, 40
        %v1590 = vpop.permute.xlu0 %1589
        %v1593 = vsel %vm1008, %v1588, 0
        %1595 = vmatprep.subr.mxu0 0.0
        %1596 = vmatpush1.msra.mxu0 %v1590
        %1597 = vmatprep.subr.mxu0 0.0
        %1598 = vmatpush1.msra.mxu0 0.0
        %1599 = vmatprep.subr.mxu0 0.0
        %1600 = vmatpush1.msra.mxu0 0.0
        %1601 = vmatprep.subr.mxu0 0.0
        %1602 = vmatpush1.msra.mxu0 0.0
        %1603 = vmatprep.subr.mxu0 0.0
        %1604 = vmatpush1.msra.mxu0 0.0
        %1605 = vmatprep.subr.mxu0 0.0
        %1606 = vmatpush1.msra.mxu0 0.0
        %1607 = vmatprep.subr.mxu0 0.0
        %1608 = vmatpush1.msra.mxu0 0.0
        %1609 = vmatprep.subr.mxu0 0.0
        %1610 = vmatpush1.msra.mxu0 0.0
        %1611 = vmatprep.subr.mxu0 0.0
        %1612 = vmatpush1.msra.mxu0 0.0
        %1613 = vmatprep.subr.mxu0 0.0
        %1614 = vmatpush1.msra.mxu0 0.0
        %1615 = vmatprep.subr.mxu0 0.0
        %1616 = vmatpush1.msra.mxu0 0.0
        %1617 = vmatprep.subr.mxu0 0.0
        %1618 = vmatpush1.msra.mxu0 0.0
        %1619 = vmatprep.subr.mxu0 0.0
        %1620 = vmatpush1.msra.mxu0 0.0
        %1621 = vmatprep.subr.mxu0 0.0
        %1622 = vmatpush1.msra.mxu0 0.0
        %1623 = vmatprep.subr.mxu0 0.0
        %1624 = vmatpush1.msra.mxu0 0.0
        %1625 = vmatprep.subr.mxu0 0.0
        %1626 = vmatpush1.msra.mxu0 0.0
        %1627 = vmatprep.subr.mxu0 0.0
        %1628 = vmatpush1.msra.mxu0 0.0
        %1629 = vmatprep.subr.mxu0 0.0
        %1630 = vmatpush1.msra.mxu0 0.0
        %1631 = vmatprep.subr.mxu0 0.0
        %1632 = vmatpush1.msra.mxu0 0.0
        %1633 = vmatprep.subr.mxu0 0.0
        %1634 = vmatpush1.msra.mxu0 0.0
        %1635 = vmatprep.subr.mxu0 0.0
        %1636 = vmatpush1.msra.mxu0 0.0
        %1637 = vmatprep.subr.mxu0 0.0
        %1638 = vmatpush1.msra.mxu0 0.0
        %1639 = vmatprep.subr.mxu0 0.0
        %1640 = vmatpush1.msra.mxu0 0.0
        %1641 = vmatprep.subr.mxu0 0.0
        %1642 = vmatpush1.msra.mxu0 0.0
        %1643 = vmatprep.subr.mxu0 0.0
        %1644 = vmatpush1.msra.mxu0 0.0
        %1645 = vmatprep.subr.mxu0 0.0
        %1646 = vmatpush1.msra.mxu0 0.0
        %1647 = vmatprep.subr.mxu0 0.0
        %1648 = vmatpush1.msra.mxu0 0.0
        %1649 = vmatprep.subr.mxu0 0.0
        %1650 = vmatpush1.msra.mxu0 0.0
        %1651 = vmatprep.subr.mxu0 0.0
        %1652 = vmatpush1.msra.mxu0 0.0
        %1653 = vmatprep.subr.mxu0 0.0
        %1654 = vmatpush1.msra.mxu0 0.0
        %1655 = vmatprep.subr.mxu0 0.0
        %1656 = vmatpush1.msra.mxu0 0.0
        %1657 = vmatprep.subr.mxu0 0.0
        %1658 = vmatpush1.msra.mxu0 0.0
        %1659 = vmatprep.mubr.f32.mxu0 0.0
        %1660 = vmatmul.mubr.f32.gmra.mrb[0].mxu0 %v1593
        %v1661 = vpop.f32.mrb[0].mxu0
        %v1662 = vadd.f32 0.0, %v1661
        %v1663 = vpop.f32.mrb[0].mxu0
        %1664 = vdwg.mxu0
        %1666 = vrot.lane.b32.xlu0 %v1332, 8
        %v1667 = vpop.permute.xlu0 %1666
        %1670 = vrot.lane.b32.xlu0 %v1497, 16
        %v1671 = vpop.permute.xlu0 %1670
        %1674 = vrot.lane.b32.xlu0 %v1662, 24
        %v1675 = vpop.permute.xlu0 %1674
        %v1677 = vsel %vm1008, %v1167, %v1667
        %vm1678 = vcmask 130048
        %v1679 = vsel %vm1678, %v1677, %v1671
        %vm1680 = vcmask 195584
        %v1681 = vsel %vm1680, %v1679, %v1675
        %v1682 = vld [vmem:[%s729] sm:$0xff]
        %v1683 = vld [vmem:[%s729 + $0x8] sm:$0xff]
        %v1684 = vld [vmem:[%s729 + $0x10] sm:$0xff]
        %v1685 = vld [vmem:[%s729 + $0x18] sm:$0xff]
        %v1686 = vld [vmem:[%s737] sm:$0x1]
        %v1688 = vlaneseq
        %v1689 = vshrl.u32 %v1688, 7
        %v1690 = vsub.s32 0, %v1689
        %v1691 = vrot.slane %v1686, %v1690
        %v1694 = vsel %vm892, %v1681, 0
        %1696 = vmatprep.subr.mxu0 0.0
        %1697 = vmatpush1.msra.mxu0 %v1682
        %1698 = vmatprep.subr.mxu0 0.0
        %1699 = vmatpush1.msra.mxu0 %v1683
        %1700 = vmatprep.subr.mxu0 0.0
        %1701 = vmatpush1.msra.mxu0 %v1684
        %1702 = vmatprep.subr.mxu0 0.0
        %1703 = vmatpush1.msra.mxu0 %v1685
        %1704 = vmatprep.subr.mxu0 0.0
        %1705 = vmatpush1.msra.mxu0 0.0
        %1706 = vmatprep.subr.mxu0 0.0
        %1707 = vmatpush1.msra.mxu0 0.0
        %1708 = vmatprep.subr.mxu0 0.0
        %1709 = vmatpush1.msra.mxu0 0.0
        %1710 = vmatprep.subr.mxu0 0.0
        %1711 = vmatpush1.msra.mxu0 0.0
        %1712 = vmatprep.subr.mxu0 0.0
        %1713 = vmatpush1.msra.mxu0 0.0
        %1714 = vmatprep.subr.mxu0 0.0
        %1715 = vmatpush1.msra.mxu0 0.0
        %1716 = vmatprep.subr.mxu0 0.0
        %1717 = vmatpush1.msra.mxu0 0.0
        %1718 = vmatprep.subr.mxu0 0.0
        %1719 = vmatpush1.msra.mxu0 0.0
        %1720 = vmatprep.subr.mxu0 0.0
        %1721 = vmatpush1.msra.mxu0 0.0
        %1722 = vmatprep.subr.mxu0 0.0
        %1723 = vmatpush1.msra.mxu0 0.0
        %1724 = vmatprep.subr.mxu0 0.0
        %1725 = vmatpush1.msra.mxu0 0.0
        %1726 = vmatprep.subr.mxu0 0.0
        %1727 = vmatpush1.msra.mxu0 0.0
        %1728 = vmatprep.subr.mxu0 0.0
        %1729 = vmatpush1.msra.mxu0 0.0
        %1730 = vmatprep.subr.mxu0 0.0
        %1731 = vmatpush1.msra.mxu0 0.0
        %1732 = vmatprep.subr.mxu0 0.0
        %1733 = vmatpush1.msra.mxu0 0.0
        %1734 = vmatprep.subr.mxu0 0.0
        %1735 = vmatpush1.msra.mxu0 0.0
        %1736 = vmatprep.subr.mxu0 0.0
        %1737 = vmatpush1.msra.mxu0 0.0
        %1738 = vmatprep.subr.mxu0 0.0
        %1739 = vmatpush1.msra.mxu0 0.0
        %1740 = vmatprep.subr.mxu0 0.0
        %1741 = vmatpush1.msra.mxu0 0.0
        %1742 = vmatprep.subr.mxu0 0.0
        %1743 = vmatpush1.msra.mxu0 0.0
        %1744 = vmatprep.subr.mxu0 0.0
        %1745 = vmatpush1.msra.mxu0 0.0
        %1746 = vmatprep.subr.mxu0 0.0
        %1747 = vmatpush1.msra.mxu0 0.0
        %1748 = vmatprep.subr.mxu0 0.0
        %1749 = vmatpush1.msra.mxu0 0.0
        %1750 = vmatprep.subr.mxu0 0.0
        %1751 = vmatpush1.msra.mxu0 0.0
        %1752 = vmatprep.subr.mxu0 0.0
        %1753 = vmatpush1.msra.mxu0 0.0
        %1754 = vmatprep.subr.mxu0 0.0
        %1755 = vmatpush1.msra.mxu0 0.0
        %1756 = vmatprep.subr.mxu0 0.0
        %1757 = vmatpush1.msra.mxu0 0.0
        %1758 = vmatprep.subr.mxu0 0.0
        %1759 = vmatpush1.msra.mxu0 0.0
        %1760 = vmatprep.mubr.f32.mxu0 0.0
        %1761 = vmatmul.mubr.f32.gmra.mrb[0].mxu0 %v1694
        %v1762 = vpop.f32.mrb[0].mxu0
        %v1763 = vadd.f32 %v1691, %v1762
        %v1764 = vpop.f32.mrb[0].mxu0
        %1765 = vdwg.mxu0
        %v1766 = vadd.f32 %v889, %v1763
        %v1767 = vld [vmem:[%s745] sm:$0x1]
        %v1768 = vld [vmem:[%s753] sm:$0x1]
        %v1769 = vsel %vm892, %v1766, 0.0
        %1770 = vadd.xlane.f32.xlu0 %v1769
        %v1771 = vpop.xlane.xlu0 %1770
        %v1772 = vmul.f32 %v1771, %v896
        %v1773 = vsub.f32 %v1766, %v1772
        %v1774 = vmul.f32 %v1773, %v1773
        %v1775 = vsel %vm892, %v1774, 0.0
        %1776 = vadd.xlane.f32.xlu0 %v1775
        %v1777 = vpop.xlane.xlu0 %1776
        %v1778 = vmul.f32 %v1777, %v896
        %v1779 = vadd.f32 %v1778, 1e-05
        %v1780 = vrsqrt.pop %v1779
        %v1781 = vmul.f32 %v1773, %v1780
        %v1783 = vlaneseq
        %v1784 = vshrl.u32 %v1783, 7
        %v1785 = vsub.s32 0, %v1784
        %v1786 = vrot.slane %v1767, %v1785
        %v1788 = vmul.f32 %v1781, %v1786
        %v1790 = vlaneseq
        %v1791 = vshrl.u32 %v1790, 7
        %v1792 = vsub.s32 0, %v1791
        %v1793 = vrot.slane %v1768, %v1792
        %v1795 = vadd.f32 %v1788, %v1793
        %v1796 = vld [vmem:[%s762] sm:$0xff]
        %v1797 = vld [vmem:[%s762 + $0x8] sm:$0xff]
        %v1798 = vld [vmem:[%s762 + $0x10] sm:$0xff]
        %v1799 = vld [vmem:[%s762 + $0x18] sm:$0xff]
        %v1800 = vld [vmem:[%s770] sm:$0x1]
        %v1802 = vlaneseq
        %v1803 = vshrl.u32 %v1802, 7
        %v1804 = vsub.s32 0, %v1803
        %v1805 = vrot.slane %v1800, %v1804
        %v1808 = vsel %vm892, %v1795, 0
        %1810 = vmatprep.subr.mxu0 0.0
        %1811 = vmatpush1.msra.mxu0 %v1796
        %1812 = vmatprep.subr.mxu0 0.0
        %1813 = vmatpush1.msra.mxu0 %v1797
        %1814 = vmatprep.subr.mxu0 0.0
        %1815 = vmatpush1.msra.mxu0 %v1798
        %1816 = vmatprep.subr.mxu0 0.0
        %1817 = vmatpush1.msra.mxu0 %v1799
        %1818 = vmatprep.subr.mxu0 0.0
        %1819 = vmatpush1.msra.mxu0 0.0
        %1820 = vmatprep.subr.mxu0 0.0
        %1821 = vmatpush1.msra.mxu0 0.0
        %1822 = vmatprep.subr.mxu0 0.0
        %1823 = vmatpush1.msra.mxu0 0.0
        %1824 = vmatprep.subr.mxu0 0.0
        %1825 = vmatpush1.msra.mxu0 0.0
        %1826 = vmatprep.subr.mxu0 0.0
        %1827 = vmatpush1.msra.mxu0 0.0
        %1828 = vmatprep.subr.mxu0 0.0
        %1829 = vmatpush1.msra.mxu0 0.0
        %1830 = vmatprep.subr.mxu0 0.0
        %1831 = vmatpush1.msra.mxu0 0.0
        %1832 = vmatprep.subr.mxu0 0.0
        %1833 = vmatpush1.msra.mxu0 0.0
        %1834 = vmatprep.subr.mxu0 0.0
        %1835 = vmatpush1.msra.mxu0 0.0
        %1836 = vmatprep.subr.mxu0 0.0
        %1837 = vmatpush1.msra.mxu0 0.0
        %1838 = vmatprep.subr.mxu0 0.0
        %1839 = vmatpush1.msra.mxu0 0.0
        %1840 = vmatprep.subr.mxu0 0.0
        %1841 = vmatpush1.msra.mxu0 0.0
        %1842 = vmatprep.subr.mxu0 0.0
        %1843 = vmatpush1.msra.mxu0 0.0
        %1844 = vmatprep.subr.mxu0 0.0
        %1845 = vmatpush1.msra.mxu0 0.0
        %1846 = vmatprep.subr.mxu0 0.0
        %1847 = vmatpush1.msra.mxu0 0.0
        %1848 = vmatprep.subr.mxu0 0.0
        %1849 = vmatpush1.msra.mxu0 0.0
        %1850 = vmatprep.subr.mxu0 0.0
        %1851 = vmatpush1.msra.mxu0 0.0
        %1852 = vmatprep.subr.mxu0 0.0
        %1853 = vmatpush1.msra.mxu0 0.0
        %1854 = vmatprep.subr.mxu0 0.0
        %1855 = vmatpush1.msra.mxu0 0.0
        %1856 = vmatprep.subr.mxu0 0.0
        %1857 = vmatpush1.msra.mxu0 0.0
        %1858 = vmatprep.subr.mxu0 0.0
        %1859 = vmatpush1.msra.mxu0 0.0
        %1860 = vmatprep.subr.mxu0 0.0
        %1861 = vmatpush1.msra.mxu0 0.0
        %1862 = vmatprep.subr.mxu0 0.0
        %1863 = vmatpush1.msra.mxu0 0.0
        %1864 = vmatprep.subr.mxu0 0.0
        %1865 = vmatpush1.msra.mxu0 0.0
        %1866 = vmatprep.subr.mxu0 0.0
        %1867 = vmatpush1.msra.mxu0 0.0
        %1868 = vmatprep.subr.mxu0 0.0
        %1869 = vmatpush1.msra.mxu0 0.0
        %1870 = vmatprep.subr.mxu0 0.0
        %1871 = vmatpush1.msra.mxu0 0.0
        %1872 = vmatprep.subr.mxu0 0.0
        %1873 = vmatpush1.msra.mxu0 0.0
        %1874 = vmatprep.mubr.f32.mxu0 0.0
        %1875 = vmatmul.mubr.f32.gmra.mrb[0].mxu0 %v1808
        %v1876 = vpop.f32.mrb[0].mxu0
        %v1877 = vadd.f32 %v1805, %v1876
        %v1878 = vpop.f32.mrb[0].mxu0
        %1879 = vdwg.mxu0
        %v1880 = vmul.f32 %v1877, 0.5
        %v1881 = vmul.f32 %v1877, 0.044715
        %v1882 = vmul.f32 %v1881, %v1877
        %v1883 = vmul.f32 %v1882, %v1877
        %v1884 = vadd.f32 %v1877, %v1883
        %v1885 = vmul.f32 %v1884, 0.7978846
        %v1886 = vtanh.pop %v1885
        %v1887 = vadd.f32 %v1886, 1.0
        %v1888 = vmul.f32 %v1880, %v1887
        %v1889 = vld [vmem:[%s779] sm:$0xff]
        %v1890 = vld [vmem:[%s779 + $0x8] sm:$0xff]
        %v1891 = vld [vmem:[%s779 + $0x10] sm:$0xff]
        %v1892 = vld [vmem:[%s779 + $0x18] sm:$0xff]
        %v1893 = vld [vmem:[%s779 + $0x20] sm:$0xff]
        %v1894 = vld [vmem:[%s779 + $0x28] sm:$0xff]
        %v1895 = vld [vmem:[%s779 + $0x30] sm:$0xff]
        %v1896 = vld [vmem:[%s779 + $0x38] sm:$0xff]
        %v1897 = vld [vmem:[%s787] sm:$0x1]
        %v1899 = vlaneseq
        %v1900 = vshrl.u32 %v1899, 7
        %v1901 = vsub.s32 0, %v1900
        %v1902 = vrot.slane %v1897, %v1901
        %vm1904 = vcmask 523264
        %v1906 = vsel %vm1904, %v1888, 0
        %1908 = vmatprep.subr.mxu0 0.0
        %1909 = vmatpush1.msra.mxu0 %v1889
        %1910 = vmatprep.subr.mxu0 0.0
        %1911 = vmatpush1.msra.mxu0 %v1890
        %1912 = vmatprep.subr.mxu0 0.0
        %1913 = vmatpush1.msra.mxu0 %v1891
        %1914 = vmatprep.subr.mxu0 0.0
        %1915 = vmatpush1.msra.mxu0 %v1892
        %1916 = vmatprep.subr.mxu0 0.0
        %1917 = vmatpush1.msra.mxu0 %v1893
        %1918 = vmatprep.subr.mxu0 0.0
        %1919 = vmatpush1.msra.mxu0 %v1894
        %1920 = vmatprep.subr.mxu0 0.0
        %1921 = vmatpush1.msra.mxu0 %v1895
        %1922 = vmatprep.subr.mxu0 0.0
        %1923 = vmatpush1.msra.mxu0 %v1896
        %1924 = vmatprep.subr.mxu0 0.0
        %1925 = vmatpush1.msra.mxu0 0.0
        %1926 = vmatprep.subr.mxu0 0.0
        %1927 = vmatpush1.msra.mxu0 0.0
        %1928 = vmatprep.subr.mxu0 0.0
        %1929 = vmatpush1.msra.mxu0 0.0
        %1930 = vmatprep.subr.mxu0 0.0
        %1931 = vmatpush1.msra.mxu0 0.0
        %1932 = vmatprep.subr.mxu0 0.0
        %1933 = vmatpush1.msra.mxu0 0.0
        %1934 = vmatprep.subr.mxu0 0.0
        %1935 = vmatpush1.msra.mxu0 0.0
        %1936 = vmatprep.subr.mxu0 0.0
        %1937 = vmatpush1.msra.mxu0 0.0
        %1938 = vmatprep.subr.mxu0 0.0
        %1939 = vmatpush1.msra.mxu0 0.0
        %1940 = vmatprep.subr.mxu0 0.0
        %1941 = vmatpush1.msra.mxu0 0.0
        %1942 = vmatprep.subr.mxu0 0.0
        %1943 = vmatpush1.msra.mxu0 0.0
        %1944 = vmatprep.subr.mxu0 0.0
        %1945 = vmatpush1.msra.mxu0 0.0
        %1946 = vmatprep.subr.mxu0 0.0
        %1947 = vmatpush1.msra.mxu0 0.0
        %1948 = vmatprep.subr.mxu0 0.0
        %1949 = vmatpush1.msra.mxu0 0.0
        %1950 = vmatprep.subr.mxu0 0.0
        %1951 = vmatpush1.msra.mxu0 0.0
        %1952 = vmatprep.subr.mxu0 0.0
        %1953 = vmatpush1.msra.mxu0 0.0
        %1954 = vmatprep.subr.mxu0 0.0
        %1955 = vmatpush1.msra.mxu0 0.0
        %1956 = vmatprep.subr.mxu0 0.0
        %1957 = vmatpush1.msra.mxu0 0.0
        %1958 = vmatprep.subr.mxu0 0.0
        %1959 = vmatpush1.msra.mxu0 0.0
        %1960 = vmatprep.subr.mxu0 0.0
        %1961 = vmatpush1.msra.mxu0 0.0
        %1962 = vmatprep.subr.mxu0 0.0
        %1963 = vmatpush1.msra.mxu0 0.0
        %1964 = vmatprep.subr.mxu0 0.0
        %1965 = vmatpush1.msra.mxu0 0.0
        %1966 = vmatprep.subr.mxu0 0.0
        %1967 = vmatpush1.msra.mxu0 0.0
        %1968 = vmatprep.subr.mxu0 0.0
        %1969 = vmatpush1.msra.mxu0 0.0
        %1970 = vmatprep.subr.mxu0 0.0
        %1971 = vmatpush1.msra.mxu0 0.0
        %1972 = vmatprep.mubr.f32.mxu0 0.0
        %1973 = vmatmul.mubr.f32.gmra.mrb[0].mxu0 %v1906
        %v1974 = vpop.f32.mrb[0].mxu0
        %v1975 = vadd.f32 %v1902, %v1974
        %v1976 = vpop.f32.mrb[0].mxu0
        %1977 = vdwg.mxu0
        %v1978 = vadd.f32 %v1766, %v1975
        %1979 = vst.msk [vmem:[#allocation2] sm:$0xff] %vm892, %v1978
        %p1980 = scmp.eq.s32.totalorder %s53, 1
        // Predicated region
        $region129: #{tpu_custom_call.1} parent=71 // pred_check
          %p1981 = pneg %p1980
        $region130: #{tpu_custom_call.1} parent=71 // pred_check_branch
          %1983 = sbr.rel (%p1981) target = $region132
        $region131: #{tpu_custom_call.1} parent=71 // pred_region
          %1984 = vst.msk [vmem:[%s881] sm:$0xff] %vm892, %v1978
        $region132: #{tpu_custom_call.1} parent=71 // pred_fallthru
          _
        %s1985 = sand.u32 %s406, 1
        %s1986 = scalar_lea.sflag [#allocation5], %s1985
        %s1987 = sand.u32 %s406, 1
        %s1988 = smul.addr %s1987, 8
        %s1989 = scalar_lea.vmem [#allocation24], %s1988
        // Predicated region
        $region133: #{tpu_custom_call.1} parent=71 // pred_check
          %p1990 = pneg %p416
        $region134: #{tpu_custom_call.1} parent=71 // pred_check_branch
          %1992 = sbr.rel (%p1990) target = $region136
        $region135: #{tpu_custom_call.1} parent=71 // pred_region
          %s1994 = ssub.s32 128, 128
          %1995 = vsyncadd %s1986, %s1994
          %s1996 = smul.addr %s52, 128
          %s1997 = scalar_lea.hbm %s13, %s1996
          %s1999 = sshll.u32 %s1989, 4
          %s2000 = int_to_ptr.vmem [resolvable:$true] %s1999
          %2002 = dma.vmem_to_hbm [thread:$0]  %s2000, 128, %s1997, %s1986
        $region136: #{tpu_custom_call.1} parent=71 // pred_fallthru
          _
      $region72: #{tpu_custom_call.1} parent=5 // pred_fallthru
        _
      %p2003 = scmp.le.s32.totalorder 2, %s43
      // Predicated region
      $region137: #{tpu_custom_call.1} parent=5 // pred_check
        %p2004 = pneg %p2003
      $region138: #{tpu_custom_call.1} parent=5 // pred_check_branch
        %2006 = sbr.rel (%p2004) target = $region140
      $region139: #{tpu_custom_call.1} parent=5 // pred_region
        %s2007 = ssub.s32 %s43, 2
        // Predicated region
        $region141: #{tpu_custom_call.1} parent=139 // pred_check
          %p2008 = pneg %p422
        $region142: #{tpu_custom_call.1} parent=139 // pred_check_branch
          %2010 = sbr.rel (%p2008) target = $region144
        $region143: #{tpu_custom_call.1} parent=139 // pred_region
          %s2011 = sand.u32 %s407, 1
          %s2012 = scalar_lea.sflag [#allocation5], %s2011
          %s2013 = sand.u32 %s407, 1
          %s2014 = smul.addr %s2013, 8
          %s2015 = scalar_lea.vmem [#allocation24], %s2014
          %2016 = dma.done %s2012, 128
        $region144: #{tpu_custom_call.1} parent=139 // pred_fallthru
          _
      $region140: #{tpu_custom_call.1} parent=5 // pred_fallthru
        _
    $region6: #{tpu_custom_call.1} parent=1 // loop_footer
      %s47 = sadd.s32 1, %s43
    $region7: #{tpu_custom_call.1} parent=1 // loop_footer_branch
      %42 = sbr.rel target = $region3
    $region8: #{tpu_custom_call.1} parent=1 // loop_exit
      _
    %2017 = vsyncpa [#allocation4], 1
    %s2018 = scalar_lea.sflag [#allocation4], 1
    %2019 = vsyncpa %s2018, 1
    %2020 = vsyncpa [#allocation7], 1
    %s2021 = scalar_lea.sflag [#allocation7], 1
    %2022 = vsyncpa %s2021, 1
    %2023 = vsyncpa [#allocation10], 1
    %s2024 = scalar_lea.sflag [#allocation10], 1
    %2025 = vsyncpa %s2024, 1
    %2026 = vsyncpa [#allocation13], 1
    %s2027 = scalar_lea.sflag [#allocation13], 1
    %2028 = vsyncpa %s2027, 1
    %2029 = vsyncpa [#allocation16], 1
    %s2030 = scalar_lea.sflag [#allocation16], 1
    %2031 = vsyncpa %s2030, 1
    %2032 = vsyncpa [#allocation19], 1
    %s2033 = scalar_lea.sflag [#allocation19], 1
    %2034 = vsyncpa %s2033, 1
    %2035 = vsyncpa [#allocation22], 1
    %s2036 = scalar_lea.sflag [#allocation22], 1
    %2037 = vsyncpa %s2036, 1
    %2038 = vsyncpa [#allocation5], 1
    %s2039 = scalar_lea.sflag [#allocation5], 1
    %2040 = vsyncpa %s2039, 1

</llo_original>
